<compile_context>
chip_gen: v7x
topology: tpu7x:2x2x1
jax: 0.10.0
libtpu: 0.0.40
codegen_flags: <defaults>
</compile_context>

<pallas_src>
import math

import jax
import jax.numpy as jnp
from jax.experimental import pallas as pl
from jax.experimental.pallas import tpu as pltpu


# ----------------------------- fused Pallas kernel ---------------------------

def make_convcnp_kernel(ksize, ng_pad, tn, cout):
    """Fused ConvCNP forward. grid = (batch, nt_tiles).

    Coordinates are pre-scaled by sqrt(0.5)/length_scale, so every RBF is
    exp(-diff^2) (one EUP exp, one MXU matmul per set-conv).
    """
    pad = (ksize - 1) // 2

    def kernel(gp_ref, ngv_ref, cx_ref, cy_ref, tx_ref,
               w0_ref, b0_ref, w1_ref, b1_ref, w2_ref, b2_ref,
               whs_ref, bhs_ref,
               mean_ref, sigma_ref,
               hw_ref):
        x_min = gp_ref[0]            # scaled grid origin (SMEM f32)
        step = gp_ref[1]             # scaled grid step   (SMEM f32)

        # ------- encoder + CNN + head-fold: once per batch element -------
        @pl.when(pl.program_id(1) == 0)
        def _():
            ng_valid = ngv_ref[0]                                # true grid length
            cx = cx_ref[0]                                       # (Nc, 1)  scaled
            cy = cy_ref[0]                                       # (Cin, Nc)

            lane = jax.lax.broadcasted_iota(jnp.int32, (1, ng_pad), 1)
            xg = x_min + lane.astype(jnp.float32) * step         # (1, Ng_pad)
            valid = lane < ng_valid                              # (1, Ng_pad)

            # l0 set-conv onto the grid: single exp + single MXU matmul.
            k_enc = jnp.exp(-jnp.square(cx - xg))                # (Nc, Ng_pad)
            nc = cy.shape[1]
            y_aug = jnp.concatenate([jnp.ones((1, nc), jnp.float32), cy], axis=0)
            feat = jnp.dot(y_aug, k_enc,
                           preferred_element_type=jnp.float32)   # (C0, Ng_pad)
            density = feat[:1, :]
            conv = feat[1:, :] * pl.reciprocal(density + 1e-8, approx=True)
            feat = jnp.concatenate([density, conv], axis=0)      # (C0, Ng_pad)

            h = jnp.dot(w0_ref[...], feat,
                        preferred_element_type=jnp.float32) + b0_ref[...]
            h = jax.nn.sigmoid(h)
            h = jnp.where(valid, h, 0.0)                         # (rho_in, Ng_pad)

            # 'same' Conv1d as K rolled matmul-accumulates (XLU + MXU).
            # ng_pad >= num_points + ksize, so wrapped lanes are always either
            # zero (masked x) or masked outputs => identical to zero padding.
            def conv_layer(x, w_ref, b_ref, relu):
                c_out = w_ref.shape[0] // ksize
                acc = None
                for k in range(ksize):
                    s = (pad - k) % ng_pad
                    xr = x if s == 0 else pltpu.roll(x, shift=s, axis=1)
                    wk = w_ref[k * c_out:(k + 1) * c_out, :].astype(jnp.bfloat16)
                    term = jnp.dot(wk, xr.astype(jnp.bfloat16),
                                   preferred_element_type=jnp.float32)
                    acc = term if acc is None else acc + term
                y = acc + b_ref[...]
                if relu:
                    y = jnp.maximum(y, 0.0)
                return jnp.where(valid, y, 0.0)

            h = conv_layer(h, w1_ref, b1_ref, True)              # (rho_hidden, Ng_pad)
            h = conv_layer(h, w2_ref, b2_ref, False)             # (rho_out,   Ng_pad)

            # Fold mean/sigma head weights BEFORE the big decoder matmul.
            hw_ref[...] = jnp.dot(whs_ref[...], h,
                                  preferred_element_type=jnp.float32)  # (2*Cout, Ng_pad)

        # ------- decoder set-conv for this Nt tile (every grid step) -------
        tx = tx_ref[0]                                           # (1, tn)  scaled
        gcol = jax.lax.broadcasted_iota(jnp.int32, (ng_pad, 1), 0)
        xg_col = x_min + gcol.astype(jnp.float32) * step         # (Ng_pad, 1)
        k_dec = jnp.exp(-jnp.square(xg_col - tx)).astype(jnp.bfloat16)  # (Ng_pad, tn)

        out = jnp.dot(hw_ref[...].astype(jnp.bfloat16), k_dec,
                      preferred_element_type=jnp.float32) + bhs_ref[...]  # (2*Cout, tn)
        mean_ref[0] = out[:cout].astype(mean_ref.dtype)
        sigma_ref[0] = jax.nn.softplus(out[cout:]).astype(sigma_ref.dtype)

    return kernel


# --------------------------------- Model -------------------------------------

class ConvCNPPallas:
    def __init__(self, in_channels, out_channels, points_per_unit,
                 rho_in=8, rho_hidden=16, rho_out=8, ksize=5, seed=0,
                 x_range=None):
        self.in_channels = in_channels
        self.out_channels = out_channels
        self.points_per_unit = points_per_unit
        self.rho_in, self.rho_hidden, self.rho_out = rho_in, rho_hidden, rho_out
        self.ksize = ksize
        self.x_range = x_range               # optional static (lo, hi) data bound
        # rho = simple 2-layer CNN, stride 1 => no halving layers.
        self.num_halving_layers = 0
        self.multiplier = 2 ** self.num_halving_layers

        # exp(log(init_length_scale)) == init_length_scale, identical per channel.
        self.init_length_scale = 2.0 / points_per_unit
        # pre-scale coords by sqrt(0.5)/ls so the RBF is exp(-diff^2) in-kernel.
        self.coord_scale = math.sqrt(0.5) / self.init_length_scale

        # Deterministic parameter init (stand-in for init_sequential_weights),
        # channels-first; conv weights stacked as (K*Cout, Cin) tap blocks.
        keys = jax.random.split(jax.random.PRNGKey(seed), 10)

        def lin(key, fan_out, fan_in, denom):
            return (jax.random.normal(key, (fan_out, fan_in), jnp.float32)
                    / math.sqrt(float(denom)))

        c0 = in_channels + 1
        self.w0 = lin(keys[0], rho_in, c0, c0)
        self.b0 = 0.01 * jax.random.normal(keys[1], (rho_in, 1), jnp.float32)
        self.w1 = lin(keys[2], ksize * rho_hidden, rho_in, ksize * rho_in)
        self.b1 = 0.01 * jax.random.normal(keys[3], (rho_hidden, 1), jnp.float32)
        self.w2 = lin(keys[4], ksize * rho_out, rho_hidden, ksize * rho_hidden)
        self.b2 = 0.01 * jax.random.normal(keys[5], (rho_out, 1), jnp.float32)
        wm = lin(keys[6], out_channels, rho_out, rho_out)
        bm = 0.01 * jax.random.normal(keys[7], (out_channels, 1), jnp.float32)
        ws = lin(keys[8], out_channels, rho_out, rho_out)
        bs = 0.01 * jax.random.normal(keys[9], (out_channels, 1), jnp.float32)
        self.whs = jnp.concatenate([wm, ws], axis=0)           # (2*Cout, rho_out)
        self.bhs = jnp.concatenate([bm, bs], axis=0)           # (2*Cout, 1)

        self._cache = {}   # (B, Nc, Cin, Nt, ng_pad, nt_pad) -> jitted forward

    # ----- static grid-length bucket (128-aligned, + ksize roll guard) -----
    def _grid_bucket(self, x_lo, x_hi):
        x_min = min(float(x_lo), -2.0) - 0.1
        x_max = max(float(x_hi), 2.0) + 0.1
        v = self.points_per_unit * (x_max - x_min)
        m = self.multiplier
        npts = int(v) if v % m == 0 else int(v + m - v % m)
        return max(128, -(-(npts + self.ksize) // 128) * 128)

    # ----- build (once per shape bucket) the fully jitted forward pass -----
    def _get_forward(self, B, Nc, Cin, Nt, ng_pad, nt_pad):
        key = (B, Nc, Cin, Nt, ng_pad, nt_pad)
        if key in self._cache:
            return self._cache[key]

        cout = self.out_channels
        c0 = Cin + 1

        # Target-axis tile: large lane-dense slabs, bounded decoder working set.
        if nt_pad % 512 == 0:
            tn = 512
        elif nt_pad % 256 == 0:
            tn = 256
        else:
            tn = 128
        while tn > 128 and ng_pad * tn * 16 > 24 * (1 << 20):
            tn //= 2
        n_tiles = nt_pad // tn

        vmem_limit = int(min(56 * (1 << 20),
                             max(32 * (1 << 20), ng_pad * tn * 20 + 4 * (1 << 20))))

        kernel = make_convcnp_kernel(self.ksize, ng_pad, tn, cout)

        def wspec(shape):
            return pl.BlockSpec(shape, lambda b, t: (0, 0))

        smem = pl.BlockSpec(memory_space=pltpu.MemorySpace.SMEM)

        fused = pl.pallas_call(
            kernel,
            out_shape=(jax.ShapeDtypeStruct((B, cout, nt_pad), jnp.float32),
                       jax.ShapeDtypeStruct((B, cout, nt_pad), jnp.float32)),
            grid=(B, n_tiles),
            in_specs=[
                smem,                                                   # [x_min*s, step*s]
                smem,                                                   # [num_points]
                pl.BlockSpec((1, Nc, 1), lambda b, t: (b, 0, 0)),       # context_x (scaled)
                pl.BlockSpec((1, Cin, Nc), lambda b, t: (b, 0, 0)),     # context_y (CF)
                pl.BlockSpec((1, 1, tn), lambda b, t: (b, 0, t)),       # target_x tile
                wspec((self.rho_in, c0)), wspec((self.rho_in, 1)),
                wspec((self.ksize * self.rho_hidden, self.rho_in)),
                wspec((self.rho_hidden, 1)),
                wspec((self.ksize * self.rho_out, self.rho_hidden)),
                wspec((self.rho_out, 1)),
                wspec((2 * cout, self.rho_out)), wspec((2 * cout, 1)),
            ],
            out_specs=(pl.BlockSpec((1, cout, tn), lambda b, t: (b, 0, t)),
                       pl.BlockSpec((1, cout, tn), lambda b, t: (b, 0, t))),
            scratch_shapes=[pltpu.VMEM((2 * cout, ng_pad), jnp.float32)],
            compiler_params=pltpu.CompilerParams(
                dimension_semantics=("parallel", "arbitrary"),
                vmem_limit_bytes=vmem_limit),
        )

        ppu = float(self.points_per_unit)
        mult = float(self.multiplier)
        scale = self.coord_scale

        def forward(context_x, context_y, target_x, target_y):
            # Data-dependent grid parameters computed ON DEVICE (no host sync);
            # only the 128-bucketed grid length is static.
            x_min = jnp.minimum(jnp.minimum(jnp.min(context_x), jnp.min(target_x)),
                                jnp.float32(-2.0)) - 0.1
            x_max = jnp.maximum(jnp.maximum(jnp.max(context_x), jnp.max(target_x)),
                                jnp.float32(2.0)) + 0.1
            v = ppu * (x_max - x_min)
            r = jnp.mod(v, mult)
            npts = jnp.where(r == 0.0, jnp.floor(v),
                             mult * (jnp.floor(v / mult) + 1.0))
            npts = jnp.minimum(npts, jnp.float32(ng_pad - self.ksize))  # safety clamp
            step = (x_max - x_min) / (npts - 1.0)

            gp = jnp.stack([x_min * scale, step * scale]).astype(jnp.float32)
            ngv = npts.astype(jnp.int32).reshape(1)

            cx_s = (context_x * scale).astype(jnp.float32)              # (B, Nc, 1)
            cy_cf = jnp.transpose(context_y, (0, 2, 1))                 # (B, Cin, Nc)
            tx_row = jnp.transpose(target_x, (0, 2, 1)) * scale         # (B, 1, Nt)
            tx_pad = jnp.pad(tx_row, ((0, 0), (0, 0), (0, nt_pad - Nt)))

            mean_cf, sigma_cf = fused(gp, ngv, cx_s, cy_cf, tx_pad,
                                      self.w0, self.b0, self.w1, self.b1,
                                      self.w2, self.b2, self.whs, self.bhs)

            mean = jnp.transpose(mean_cf[:, :, :Nt], (0, 2, 1))         # (B, Nt, Cout)
            sigma = jnp.transpose(sigma_cf[:, :, :Nt], (0, 2, 1))       # (B, Nt, Cout)

            # Independent(Normal(mean, sigma), 1).log_prob(target_y); loss = -logp
            log_prob = jnp.sum(
                -0.5 * jnp.square((target_y - mean) / sigma)
                - jnp.log(sigma)
                - 0.5 * jnp.log(2.0 * jnp.pi),
                axis=-1)                                                 # (B, Nt)
            return mean, sigma, -log_prob

        fwd = jax.jit(forward)
        self._cache[key] = fwd
        return fwd

    def __call__(self, context_x, context_y, target_x, target_y):
        context_x = jnp.asarray(context_x, jnp.float32)   # (B, Nc, 1)
        context_y = jnp.asarray(context_y, jnp.float32)   # (B, Nc, Cin)
        target_x = jnp.asarray(target_x, jnp.float32)     # (B, Nt, 1)
        target_y = jnp.asarray(target_y, jnp.float32)     # (B, Nt, Cout)

        B, Nc, _ = context_x.shape
        Cin = context_y.shape[-1]
        Nt = target_x.shape[1]

        if self.x_range is not None:
            # Static conservative bound: no per-call host sync.
            ng_pad = self._grid_bucket(*self.x_range)
        else:
            # Fallback: one host sync (mirrors the reference's .cpu().numpy()).
            stats = jax.device_get(jnp.stack([
                jnp.min(context_x), jnp.min(target_x),
                jnp.max(context_x), jnp.max(target_x)]))
            ng_pad = self._grid_bucket(min(float(stats[0]), float(stats[1])),
                                       max(float(stats[2]), float(stats[3])))
        nt_pad = max(128, -(-Nt // 128) * 128)

        fwd = self._get_forward(B, Nc, Cin, Nt, ng_pad, nt_pad)
        return fwd(context_x, context_y, target_x, target_y)


# --------------------------------- Driver -------------------------------------

if __name__ == "__main__":
    key = jax.random.PRNGKey(0)
    kcx, kcy, ktx, kty = jax.random.split(key, 4)

    B, Nc, Nt = 2, 10, 12
    in_channels, out_channels = 1, 1

    context_x = jax.random.uniform(kcx, (B, Nc, 1), jnp.float32, -2.0, 2.0)
    context_y = jax.random.normal(kcy, (B, Nc, in_channels), jnp.float32)
    target_x = jax.random.uniform(ktx, (B, Nt, 1), jnp.float32, -2.0, 2.0)
    target_y = jax.random.normal(kty, (B, Nt, out_channels), jnp.float32)

    model = ConvCNPPallas(in_channels, out_channels, points_per_unit=16,
                          seed=0, x_range=(-2.0, 2.0))
    mean, sigma, loss = model(context_x, context_y, target_x, target_y)
    jax.block_until_ready((mean, sigma, loss))

    assert mean.shape == (B, Nt, out_channels)
    assert sigma.shape == (B, Nt, out_channels)
    assert loss.shape == (B, Nt)
    assert bool(jnp.all(sigma > 0.0))
    assert bool(jnp.all(jnp.isfinite(mean)))
    assert bool(jnp.all(jnp.isfinite(loss)))
    print("KERNEL_OK")
</pallas_src>

<mosaic_0001>
module attributes {stable_mosaic.version = 11 : i64} {
  func.func @kernel(%arg0: i32, %arg1: i32, %arg2: memref<2xf32, #tpu.memory_space<smem>>, %arg3: memref<1xi32, #tpu.memory_space<smem>>, %arg4: memref<1x10x1xf32, #tpu.memory_space<vmem>>, %arg5: memref<1x1x10xf32, #tpu.memory_space<vmem>>, %arg6: memref<1x1x128xf32, #tpu.memory_space<vmem>>, %arg7: memref<8x2xf32, #tpu.memory_space<vmem>>, %arg8: memref<8x1xf32, #tpu.memory_space<vmem>>, %arg9: memref<80x8xf32, #tpu.memory_space<vmem>>, %arg10: memref<16x1xf32, #tpu.memory_space<vmem>>, %arg11: memref<40x16xf32, #tpu.memory_space<vmem>>, %arg12: memref<8x1xf32, #tpu.memory_space<vmem>>, %arg13: memref<2x8xf32, #tpu.memory_space<vmem>>, %arg14: memref<2x1xf32, #tpu.memory_space<vmem>>, %arg15: memref<1x1x128xf32, #tpu.memory_space<vmem>>, %arg16: memref<1x1x128xf32, #tpu.memory_space<vmem>>, %arg17: memref<2x128xf32, #tpu.memory_space<vmem>>) attributes {dimension_semantics = [#tpu.dimension_semantics<parallel>, #tpu.dimension_semantics<arbitrary>], iteration_bounds = array<i64: 2, 1>, scalar_prefetch = 0 : i64, scratch_operands = 1 : i64, tpu.core_type = #tpu.core_type<tc>, window_params = [{transform_indices = @transform_0, window_bounds = array<i64: 2>}, {transform_indices = @transform_1, window_bounds = array<i64: 1>}, {transform_indices = @transform_2, window_bounds = array<i64: 1, 10, 1>}, {transform_indices = @transform_3, window_bounds = array<i64: 1, 1, 10>}, {transform_indices = @transform_4, window_bounds = array<i64: 1, 1, 128>}, {pipeline_mode = #tpu.pipeline_mode<synchronous>, transform_indices = @transform_5, window_bounds = array<i64: 8, 2>}, {pipeline_mode = #tpu.pipeline_mode<synchronous>, transform_indices = @transform_6, window_bounds = array<i64: 8, 1>}, {pipeline_mode = #tpu.pipeline_mode<synchronous>, transform_indices = @transform_7, window_bounds = array<i64: 80, 8>}, {pipeline_mode = #tpu.pipeline_mode<synchronous>, transform_indices = @transform_8, window_bounds = array<i64: 16, 1>}, {pipeline_mode = #tpu.pipeline_mode<synchronous>, transform_indices = @transform_9, window_bounds = array<i64: 40, 16>}, {pipeline_mode = #tpu.pipeline_mode<synchronous>, transform_indices = @transform_10, window_bounds = array<i64: 8, 1>}, {pipeline_mode = #tpu.pipeline_mode<synchronous>, transform_indices = @transform_11, window_bounds = array<i64: 2, 8>}, {pipeline_mode = #tpu.pipeline_mode<synchronous>, transform_indices = @transform_12, window_bounds = array<i64: 2, 1>}, {transform_indices = @transform_13, window_bounds = array<i64: 1, 1, 128>}, {transform_indices = @transform_14, window_bounds = array<i64: 1, 1, 128>}]} {
    %c0 = arith.constant 0 : index
    %0 = memref.load %arg2[%c0] : memref<2xf32, #tpu.memory_space<smem>>
    %c1 = arith.constant 1 : index
    %1 = memref.load %arg2[%c1] : memref<2xf32, #tpu.memory_space<smem>>
    %c0_i32 = arith.constant 0 : i32
    %2 = arith.cmpi eq, %arg1, %c0_i32 : i32
    %3 = arith.extui %2 : i1 to i32
    %c0_i32_0 = arith.constant 0 : i32
    %4 = arith.cmpi ne, %3, %c0_i32_0 : i32
    scf.if %4 {
      %c0_17 = arith.constant 0 : index
      %49 = memref.load %arg3[%c0_17] : memref<1xi32, #tpu.memory_space<smem>>
      %c0_18 = arith.constant 0 : index
      %c0_19 = arith.constant 0 : index
      %c0_20 = arith.constant 0 : index
      %50 = vector.load %arg4[%c0_18, %c0_19, %c0_20] : memref<1x10x1xf32, #tpu.memory_space<vmem>>, vector<1x10x1xf32>
      %51 = vector.shape_cast %50 : vector<1x10x1xf32> to vector<10x1xf32>
      %c0_21 = arith.constant 0 : index
      %c0_22 = arith.constant 0 : index
      %c0_23 = arith.constant 0 : index
      %52 = vector.load %arg5[%c0_21, %c0_22, %c0_23] : memref<1x1x10xf32, #tpu.memory_space<vmem>>, vector<1x1x10xf32>
      %53 = vector.shape_cast %52 : vector<1x1x10xf32> to vector<1x10xf32>
      %54 = tpu.iota {dimensions = array<i32: 1>} : vector<1x128xi32>
      %55 = arith.sitofp %54 : vector<1x128xi32> to vector<1x128xf32>
      %56 = vector.broadcast %1 : f32 to vector<1x128xf32>
      %57 = arith.mulf %55, %56 : vector<1x128xf32>
      %58 = vector.broadcast %0 : f32 to vector<1x128xf32>
      %59 = arith.addf %58, %57 : vector<1x128xf32>
      %60 = vector.broadcast %49 : i32 to vector<1x128xi32>
      %61 = arith.cmpi slt, %54, %60 : vector<1x128xi32>
      %62 = vector.broadcast %51 : vector<10x1xf32> to vector<10x128xf32>
      %63 = vector.broadcast %59 : vector<1x128xf32> to vector<10x128xf32>
      %64 = arith.subf %62, %63 : vector<10x128xf32>
      %65 = arith.mulf %64, %64 : vector<10x128xf32>
      %cst_24 = arith.constant 0.000000e+00 : f32
      %66 = vector.broadcast %cst_24 : f32 to vector<10x128xf32>
      %67 = arith.subf %66, %65 : vector<10x128xf32>
      %68 = math.exp %67 : vector<10x128xf32>
      %cst_25 = arith.constant 1.000000e+00 : f32
      %69 = vector.broadcast %cst_25 : f32 to vector<1x10xf32>
      %70 = tpu.concatenate %69, %53 in 0 : vector<1x10xf32>, vector<1x10xf32> -> vector<2x10xf32>
      %cst_26 = arith.constant dense<0.000000e+00> : vector<2x128xf32>
      %71 = tpu.matmul %70, %68, %cst_26 {dimension_numbers = #tpu.dot_dimension_numbers<[1], [0], [0], [1], [0, 0, 1, 1], [], []>} : vector<2x10xf32>, vector<10x128xf32>, vector<2x128xf32> -> vector<2x128xf32>
      %72 = vector.extract_strided_slice %71 {offsets = [0, 0], sizes = [1, 128], strides = [1, 1]} : vector<2x128xf32> to vector<1x128xf32>
      %73 = vector.extract_strided_slice %71 {offsets = [1, 0], sizes = [1, 128], strides = [1, 1]} : vector<2x128xf32> to vector<1x128xf32>
      %cst_27 = arith.constant 9.99999993E-9 : f32
      %74 = vector.broadcast %cst_27 : f32 to vector<1x128xf32>
      %75 = arith.addf %72, %74 : vector<1x128xf32>
      %76 = tpu.reciprocal %75 {approx = true} : vector<1x128xf32> -> vector<1x128xf32>
      %77 = arith.mulf %73, %76 : vector<1x128xf32>
      %78 = tpu.concatenate %72, %77 in 0 : vector<1x128xf32>, vector<1x128xf32> -> vector<2x128xf32>
      %c0_28 = arith.constant 0 : index
      %c0_29 = arith.constant 0 : index
      %79 = vector.load %arg7[%c0_28, %c0_29] : memref<8x2xf32, #tpu.memory_space<vmem>>, vector<8x2xf32>
      %cst_30 = arith.constant dense<0.000000e+00> : vector<8x128xf32>
      %80 = tpu.matmul %79, %78, %cst_30 {dimension_numbers = #tpu.dot_dimension_numbers<[1], [0], [0], [1], [0, 0, 1, 1], [], []>} : vector<8x2xf32>, vector<2x128xf32>, vector<8x128xf32> -> vector<8x128xf32>
      %c0_31 = arith.constant 0 : index
      %c0_32 = arith.constant 0 : index
      %81 = vector.load %arg8[%c0_31, %c0_32] : memref<8x1xf32, #tpu.memory_space<vmem>>, vector<8x1xf32>
      %82 = vector.broadcast %81 : vector<8x1xf32> to vector<8x128xf32>
      %83 = arith.addf %80, %82 : vector<8x128xf32>
      %84 = arith.negf %83 : vector<8x128xf32>
      %85 = math.exp %84 : vector<8x128xf32>
      %cst_33 = arith.constant 1.000000e+00 : f32
      %86 = vector.broadcast %cst_33 : f32 to vector<8x128xf32>
      %87 = arith.addf %86, %85 : vector<8x128xf32>
      %88 = arith.divf %86, %87 : vector<8x128xf32>
      %cst_34 = arith.constant 0.000000e+00 : f32
      %89 = vector.shape_cast %61 : vector<1x128xi1> to vector<1x128xi1>
      %90 = vector.broadcast %89 : vector<1x128xi1> to vector<8x128xi1>
      %91 = vector.broadcast %cst_34 : f32 to vector<8x128xf32>
      %92 = arith.select %90, %88, %91 : vector<8x128xi1>, vector<8x128xf32>
      %c2_i32 = arith.constant 2 : i32
      %93 = tpu.dynamic_rotate %92 by %c2_i32 dim 1 : vector<8x128xf32>, i32 -> vector<8x128xf32>
      %c0_35 = arith.constant 0 : index
      %c0_36 = arith.constant 0 : index
      %94 = vector.load %arg9[%c0_35, %c0_36] : memref<80x8xf32, #tpu.memory_space<vmem>>, vector<16x8xf32>
      %95 = arith.truncf %94 : vector<16x8xf32> to vector<16x8xbf16>
      %96 = arith.truncf %93 : vector<8x128xf32> to vector<8x128xbf16>
      %cst_37 = arith.constant dense<0.000000e+00> : vector<16x128xf32>
      %97 = tpu.matmul %95, %96, %cst_37 {dimension_numbers = #tpu.dot_dimension_numbers<[1], [0], [0], [1], [0, 0, 1, 1], [], []>} : vector<16x8xbf16>, vector<8x128xbf16>, vector<16x128xf32> -> vector<16x128xf32>
      %c1_i32 = arith.constant 1 : i32
      %98 = tpu.dynamic_rotate %92 by %c1_i32 dim 1 : vector<8x128xf32>, i32 -> vector<8x128xf32>
      %c16 = arith.constant 16 : index
      %c0_38 = arith.constant 0 : index
      %99 = vector.load %arg9[%c16, %c0_38] : memref<80x8xf32, #tpu.memory_space<vmem>>, vector<16x8xf32>
      %100 = arith.truncf %99 : vector<16x8xf32> to vector<16x8xbf16>
      %101 = arith.truncf %98 : vector<8x128xf32> to vector<8x128xbf16>
      %cst_39 = arith.constant dense<0.000000e+00> : vector<16x128xf32>
      %102 = tpu.matmul %100, %101, %cst_39 {dimension_numbers = #tpu.dot_dimension_numbers<[1], [0], [0], [1], [0, 0, 1, 1], [], []>} : vector<16x8xbf16>, vector<8x128xbf16>, vector<16x128xf32> -> vector<16x128xf32>
      %103 = arith.addf %97, %102 : vector<16x128xf32>
      %c32 = arith.constant 32 : index
      %c0_40 = arith.constant 0 : index
      %104 = vector.load %arg9[%c32, %c0_40] : memref<80x8xf32, #tpu.memory_space<vmem>>, vector<16x8xf32>
      %105 = arith.truncf %104 : vector<16x8xf32> to vector<16x8xbf16>
      %106 = arith.truncf %92 : vector<8x128xf32> to vector<8x128xbf16>
      %cst_41 = arith.constant dense<0.000000e+00> : vector<16x128xf32>
      %107 = tpu.matmul %105, %106, %cst_41 {dimension_numbers = #tpu.dot_dimension_numbers<[1], [0], [0], [1], [0, 0, 1, 1], [], []>} : vector<16x8xbf16>, vector<8x128xbf16>, vector<16x128xf32> -> vector<16x128xf32>
      %108 = arith.addf %103, %107 : vector<16x128xf32>
      %c127_i32 = arith.constant 127 : i32
      %109 = tpu.dynamic_rotate %92 by %c127_i32 dim 1 : vector<8x128xf32>, i32 -> vector<8x128xf32>
      %c48 = arith.constant 48 : index
      %c0_42 = arith.constant 0 : index
      %110 = vector.load %arg9[%c48, %c0_42] : memref<80x8xf32, #tpu.memory_space<vmem>>, vector<16x8xf32>
      %111 = arith.truncf %110 : vector<16x8xf32> to vector<16x8xbf16>
      %112 = arith.truncf %109 : vector<8x128xf32> to vector<8x128xbf16>
      %cst_43 = arith.constant dense<0.000000e+00> : vector<16x128xf32>
      %113 = tpu.matmul %111, %112, %cst_43 {dimension_numbers = #tpu.dot_dimension_numbers<[1], [0], [0], [1], [0, 0, 1, 1], [], []>} : vector<16x8xbf16>, vector<8x128xbf16>, vector<16x128xf32> -> vector<16x128xf32>
      %114 = arith.addf %108, %113 : vector<16x128xf32>
      %c126_i32 = arith.constant 126 : i32
      %115 = tpu.dynamic_rotate %92 by %c126_i32 dim 1 : vector<8x128xf32>, i32 -> vector<8x128xf32>
      %c64 = arith.constant 64 : index
      %c0_44 = arith.constant 0 : index
      %116 = vector.load %arg9[%c64, %c0_44] : memref<80x8xf32, #tpu.memory_space<vmem>>, vector<16x8xf32>
      %117 = arith.truncf %116 : vector<16x8xf32> to vector<16x8xbf16>
      %118 = arith.truncf %115 : vector<8x128xf32> to vector<8x128xbf16>
      %cst_45 = arith.constant dense<0.000000e+00> : vector<16x128xf32>
      %119 = tpu.matmul %117, %118, %cst_45 {dimension_numbers = #tpu.dot_dimension_numbers<[1], [0], [0], [1], [0, 0, 1, 1], [], []>} : vector<16x8xbf16>, vector<8x128xbf16>, vector<16x128xf32> -> vector<16x128xf32>
      %120 = arith.addf %114, %119 : vector<16x128xf32>
      %c0_46 = arith.constant 0 : index
      %c0_47 = arith.constant 0 : index
      %121 = vector.load %arg10[%c0_46, %c0_47] : memref<16x1xf32, #tpu.memory_space<vmem>>, vector<16x1xf32>
      %122 = vector.broadcast %121 : vector<16x1xf32> to vector<16x128xf32>
      %123 = arith.addf %120, %122 : vector<16x128xf32>
      %cst_48 = arith.constant 0.000000e+00 : f32
      %124 = vector.broadcast %cst_48 : f32 to vector<16x128xf32>
      %125 = arith.maximumf %123, %124 : vector<16x128xf32>
      %cst_49 = arith.constant 0.000000e+00 : f32
      %126 = vector.shape_cast %61 : vector<1x128xi1> to vector<1x128xi1>
      %127 = vector.broadcast %126 : vector<1x128xi1> to vector<16x128xi1>
      %128 = vector.broadcast %cst_49 : f32 to vector<16x128xf32>
      %129 = arith.select %127, %125, %128 : vector<16x128xi1>, vector<16x128xf32>
      %c2_i32_50 = arith.constant 2 : i32
      %130 = tpu.dynamic_rotate %129 by %c2_i32_50 dim 1 : vector<16x128xf32>, i32 -> vector<16x128xf32>
      %c0_51 = arith.constant 0 : index
      %c0_52 = arith.constant 0 : index
      %131 = vector.load %arg11[%c0_51, %c0_52] : memref<40x16xf32, #tpu.memory_space<vmem>>, vector<8x16xf32>
      %132 = arith.truncf %131 : vector<8x16xf32> to vector<8x16xbf16>
      %133 = arith.truncf %130 : vector<16x128xf32> to vector<16x128xbf16>
      %cst_53 = arith.constant dense<0.000000e+00> : vector<8x128xf32>
      %134 = tpu.matmul %132, %133, %cst_53 {dimension_numbers = #tpu.dot_dimension_numbers<[1], [0], [0], [1], [0, 0, 1, 1], [], []>} : vector<8x16xbf16>, vector<16x128xbf16>, vector<8x128xf32> -> vector<8x128xf32>
      %c1_i32_54 = arith.constant 1 : i32
      %135 = tpu.dynamic_rotate %129 by %c1_i32_54 dim 1 : vector<16x128xf32>, i32 -> vector<16x128xf32>
      %c8 = arith.constant 8 : index
      %c0_55 = arith.constant 0 : index
      %136 = vector.load %arg11[%c8, %c0_55] : memref<40x16xf32, #tpu.memory_space<vmem>>, vector<8x16xf32>
      %137 = arith.truncf %136 : vector<8x16xf32> to vector<8x16xbf16>
      %138 = arith.truncf %135 : vector<16x128xf32> to vector<16x128xbf16>
      %cst_56 = arith.constant dense<0.000000e+00> : vector<8x128xf32>
      %139 = tpu.matmul %137, %138, %cst_56 {dimension_numbers = #tpu.dot_dimension_numbers<[1], [0], [0], [1], [0, 0, 1, 1], [], []>} : vector<8x16xbf16>, vector<16x128xbf16>, vector<8x128xf32> -> vector<8x128xf32>
      %140 = arith.addf %134, %139 : vector<8x128xf32>
      %c16_57 = arith.constant 16 : index
      %c0_58 = arith.constant 0 : index
      %141 = vector.load %arg11[%c16_57, %c0_58] : memref<40x16xf32, #tpu.memory_space<vmem>>, vector<8x16xf32>
      %142 = arith.truncf %141 : vector<8x16xf32> to vector<8x16xbf16>
      %143 = arith.truncf %129 : vector<16x128xf32> to vector<16x128xbf16>
      %cst_59 = arith.constant dense<0.000000e+00> : vector<8x128xf32>
      %144 = tpu.matmul %142, %143, %cst_59 {dimension_numbers = #tpu.dot_dimension_numbers<[1], [0], [0], [1], [0, 0, 1, 1], [], []>} : vector<8x16xbf16>, vector<16x128xbf16>, vector<8x128xf32> -> vector<8x128xf32>
      %145 = arith.addf %140, %144 : vector<8x128xf32>
      %c127_i32_60 = arith.constant 127 : i32
      %146 = tpu.dynamic_rotate %129 by %c127_i32_60 dim 1 : vector<16x128xf32>, i32 -> vector<16x128xf32>
      %c24 = arith.constant 24 : index
      %c0_61 = arith.constant 0 : index
      %147 = vector.load %arg11[%c24, %c0_61] : memref<40x16xf32, #tpu.memory_space<vmem>>, vector<8x16xf32>
      %148 = arith.truncf %147 : vector<8x16xf32> to vector<8x16xbf16>
      %149 = arith.truncf %146 : vector<16x128xf32> to vector<16x128xbf16>
      %cst_62 = arith.constant dense<0.000000e+00> : vector<8x128xf32>
      %150 = tpu.matmul %148, %149, %cst_62 {dimension_numbers = #tpu.dot_dimension_numbers<[1], [0], [0], [1], [0, 0, 1, 1], [], []>} : vector<8x16xbf16>, vector<16x128xbf16>, vector<8x128xf32> -> vector<8x128xf32>
      %151 = arith.addf %145, %150 : vector<8x128xf32>
      %c126_i32_63 = arith.constant 126 : i32
      %152 = tpu.dynamic_rotate %129 by %c126_i32_63 dim 1 : vector<16x128xf32>, i32 -> vector<16x128xf32>
      %c32_64 = arith.constant 32 : index
      %c0_65 = arith.constant 0 : index
      %153 = vector.load %arg11[%c32_64, %c0_65] : memref<40x16xf32, #tpu.memory_space<vmem>>, vector<8x16xf32>
      %154 = arith.truncf %153 : vector<8x16xf32> to vector<8x16xbf16>
      %155 = arith.truncf %152 : vector<16x128xf32> to vector<16x128xbf16>
      %cst_66 = arith.constant dense<0.000000e+00> : vector<8x128xf32>
      %156 = tpu.matmul %154, %155, %cst_66 {dimension_numbers = #tpu.dot_dimension_numbers<[1], [0], [0], [1], [0, 0, 1, 1], [], []>} : vector<8x16xbf16>, vector<16x128xbf16>, vector<8x128xf32> -> vector<8x128xf32>
      %157 = arith.addf %151, %156 : vector<8x128xf32>
      %c0_67 = arith.constant 0 : index
      %c0_68 = arith.constant 0 : index
      %158 = vector.load %arg12[%c0_67, %c0_68] : memref<8x1xf32, #tpu.memory_space<vmem>>, vector<8x1xf32>
      %159 = vector.broadcast %158 : vector<8x1xf32> to vector<8x128xf32>
      %160 = arith.addf %157, %159 : vector<8x128xf32>
      %cst_69 = arith.constant 0.000000e+00 : f32
      %161 = vector.shape_cast %61 : vector<1x128xi1> to vector<1x128xi1>
      %162 = vector.broadcast %161 : vector<1x128xi1> to vector<8x128xi1>
      %163 = vector.broadcast %cst_69 : f32 to vector<8x128xf32>
      %164 = arith.select %162, %160, %163 : vector<8x128xi1>, vector<8x128xf32>
      %c0_70 = arith.constant 0 : index
      %c0_71 = arith.constant 0 : index
      %165 = vector.load %arg13[%c0_70, %c0_71] : memref<2x8xf32, #tpu.memory_space<vmem>>, vector<2x8xf32>
      %cst_72 = arith.constant dense<0.000000e+00> : vector<2x128xf32>
      %166 = tpu.matmul %165, %164, %cst_72 {dimension_numbers = #tpu.dot_dimension_numbers<[1], [0], [0], [1], [0, 0, 1, 1], [], []>} : vector<2x8xf32>, vector<8x128xf32>, vector<2x128xf32> -> vector<2x128xf32>
      %c0_73 = arith.constant 0 : index
      %c0_74 = arith.constant 0 : index
      %167 = vector.load %arg17[%c0_73, %c0_74] : memref<2x128xf32, #tpu.memory_space<vmem>>, vector<2x128xf32>
      tpu.vector_store %arg17[%c0_73, %c0_74], %166 {strides = array<i32>} : memref<2x128xf32, #tpu.memory_space<vmem>>, vector<2x128xf32>,
    } else {
    }
    %c0_1 = arith.constant 0 : index
    %c0_2 = arith.constant 0 : index
    %c0_3 = arith.constant 0 : index
    %5 = vector.load %arg6[%c0_1, %c0_2, %c0_3] : memref<1x1x128xf32, #tpu.memory_space<vmem>>, vector<1x1x128xf32>
    %6 = vector.shape_cast %5 : vector<1x1x128xf32> to vector<1x128xf32>
    %7 = tpu.iota {dimensions = array<i32: 0>} : vector<128x1xi32>
    %8 = arith.sitofp %7 : vector<128x1xi32> to vector<128x1xf32>
    %9 = vector.broadcast %1 : f32 to vector<128x1xf32>
    %10 = arith.mulf %8, %9 : vector<128x1xf32>
    %11 = vector.broadcast %0 : f32 to vector<128x1xf32>
    %12 = arith.addf %11, %10 : vector<128x1xf32>
    %13 = vector.broadcast %12 : vector<128x1xf32> to vector<128x128xf32>
    %14 = vector.broadcast %6 : vector<1x128xf32> to vector<128x128xf32>
    %15 = arith.subf %13, %14 : vector<128x128xf32>
    %16 = arith.mulf %15, %15 : vector<128x128xf32>
    %cst = arith.constant 0.000000e+00 : f32
    %17 = vector.broadcast %cst : f32 to vector<128x128xf32>
    %18 = arith.subf %17, %16 : vector<128x128xf32>
    %19 = math.exp %18 : vector<128x128xf32>
    %20 = arith.truncf %19 : vector<128x128xf32> to vector<128x128xbf16>
    %c0_4 = arith.constant 0 : index
    %c0_5 = arith.constant 0 : index
    %21 = vector.load %arg17[%c0_4, %c0_5] : memref<2x128xf32, #tpu.memory_space<vmem>>, vector<2x128xf32>
    %22 = arith.truncf %21 : vector<2x128xf32> to vector<2x128xbf16>
    %cst_6 = arith.constant dense<0.000000e+00> : vector<2x128xf32>
    %23 = tpu.matmul %22, %20, %cst_6 {dimension_numbers = #tpu.dot_dimension_numbers<[1], [0], [0], [1], [0, 0, 1, 1], [], []>} : vector<2x128xbf16>, vector<128x128xbf16>, vector<2x128xf32> -> vector<2x128xf32>
    %c0_7 = arith.constant 0 : index
    %c0_8 = arith.constant 0 : index
    %24 = vector.load %arg14[%c0_7, %c0_8] : memref<2x1xf32, #tpu.memory_space<vmem>>, vector<2x1xf32>
    %25 = vector.broadcast %24 : vector<2x1xf32> to vector<2x128xf32>
    %26 = arith.addf %23, %25 : vector<2x128xf32>
    %27 = vector.extract_strided_slice %26 {offsets = [0, 0], sizes = [1, 128], strides = [1, 1]} : vector<2x128xf32> to vector<1x128xf32>
    %c0_9 = arith.constant 0 : index
    %c0_10 = arith.constant 0 : index
    %c0_11 = arith.constant 0 : index
    %28 = vector.load %arg15[%c0_9, %c0_10, %c0_11] : memref<1x1x128xf32, #tpu.memory_space<vmem>>, vector<1x1x128xf32>
    %29 = vector.shape_cast %28 : vector<1x1x128xf32> to vector<1x128xf32>
    %30 = vector.shape_cast %27 : vector<1x128xf32> to vector<1x1x128xf32>
    tpu.vector_store %arg15[%c0_9, %c0_10, %c0_11], %30 {strides = array<i32>} : memref<1x1x128xf32, #tpu.memory_space<vmem>>, vector<1x1x128xf32>,
    %31 = vector.extract_strided_slice %26 {offsets = [1, 0], sizes = [1, 128], strides = [1, 1]} : vector<2x128xf32> to vector<1x128xf32>
    %cst_12 = arith.constant 0.000000e+00 : f32
    %32 = vector.broadcast %cst_12 : f32 to vector<1x128xf32>
    %33 = arith.maximumf %31, %32 : vector<1x128xf32>
    %34 = vector.broadcast %cst_12 : f32 to vector<1x128xf32>
    %35 = arith.subf %31, %34 : vector<1x128xf32>
    %36 = arith.cmpf one, %35, %35 : vector<1x128xf32>
    %37 = vector.broadcast %cst_12 : f32 to vector<1x128xf32>
    %38 = arith.addf %31, %37 : vector<1x128xf32>
    %39 = math.absf %35 : vector<1x128xf32>
    %cst_13 = arith.constant 0.000000e+00 : f32
    %40 = vector.broadcast %cst_13 : f32 to vector<1x128xf32>
    %41 = arith.subf %40, %39 : vector<1x128xf32>
    %42 = math.exp %41 : vector<1x128xf32>
    %43 = math.log1p %42 : vector<1x128xf32>
    %44 = arith.addf %33, %43 : vector<1x128xf32>
    %45 = arith.select %36, %38, %44 : vector<1x128xi1>, vector<1x128xf32>
    %c0_14 = arith.constant 0 : index
    %c0_15 = arith.constant 0 : index
    %c0_16 = arith.constant 0 : index
    %46 = vector.load %arg16[%c0_14, %c0_15, %c0_16] : memref<1x1x128xf32, #tpu.memory_space<vmem>>, vector<1x1x128xf32>
    %47 = vector.shape_cast %46 : vector<1x1x128xf32> to vector<1x128xf32>
    %48 = vector.shape_cast %45 : vector<1x128xf32> to vector<1x1x128xf32>
    tpu.vector_store %arg16[%c0_14, %c0_15, %c0_16], %48 {strides = array<i32>} : memref<1x1x128xf32, #tpu.memory_space<vmem>>, vector<1x1x128xf32>,
    return
  }
  func.func @transform_0(%arg0: i32, %arg1: i32) -> i32 {
    %c0_i32 = arith.constant 0 : i32
    %c0_i32_0 = arith.constant 0 : i32
    return %c0_i32 : i32
  }
  func.func @transform_1(%arg0: i32, %arg1: i32) -> i32 {
    %c0_i32 = arith.constant 0 : i32
    %c0_i32_0 = arith.constant 0 : i32
    return %c0_i32 : i32
  }
  func.func @transform_2(%arg0: i32, %arg1: i32) -> (i32, i32, i32) {
    %c0_i32 = arith.constant 0 : i32
    %c0_i32_0 = arith.constant 0 : i32
    %c0_i32_1 = arith.constant 0 : i32
    return %arg0, %c0_i32, %c0_i32_0 : i32, i32, i32
  }
  func.func @transform_3(%arg0: i32, %arg1: i32) -> (i32, i32, i32) {
    %c0_i32 = arith.constant 0 : i32
    %c0_i32_0 = arith.constant 0 : i32
    %c0_i32_1 = arith.constant 0 : i32
    return %arg0, %c0_i32, %c0_i32_0 : i32, i32, i32
  }
  func.func @transform_4(%arg0: i32, %arg1: i32) -> (i32, i32, i32) {
    %c0_i32 = arith.constant 0 : i32
    %c0_i32_0 = arith.constant 0 : i32
    return %arg0, %c0_i32, %arg1 : i32, i32, i32
  }
  func.func @transform_5(%arg0: i32, %arg1: i32) -> (i32, i32) {
    %c0_i32 = arith.constant 0 : i32
    %c0_i32_0 = arith.constant 0 : i32
    %c0_i32_1 = arith.constant 0 : i32
    return %c0_i32, %c0_i32_0 : i32, i32
  }
  func.func @transform_6(%arg0: i32, %arg1: i32) -> (i32, i32) {
    %c0_i32 = arith.constant 0 : i32
    %c0_i32_0 = arith.constant 0 : i32
    %c0_i32_1 = arith.constant 0 : i32
    return %c0_i32, %c0_i32_0 : i32, i32
  }
  func.func @transform_7(%arg0: i32, %arg1: i32) -> (i32, i32) {
    %c0_i32 = arith.constant 0 : i32
    %c0_i32_0 = arith.constant 0 : i32
    %c0_i32_1 = arith.constant 0 : i32
    return %c0_i32, %c0_i32_0 : i32, i32
  }
  func.func @transform_8(%arg0: i32, %arg1: i32) -> (i32, i32) {
    %c0_i32 = arith.constant 0 : i32
    %c0_i32_0 = arith.constant 0 : i32
    %c0_i32_1 = arith.constant 0 : i32
    return %c0_i32, %c0_i32_0 : i32, i32
  }
  func.func @transform_9(%arg0: i32, %arg1: i32) -> (i32, i32) {
    %c0_i32 = arith.constant 0 : i32
    %c0_i32_0 = arith.constant 0 : i32
    %c0_i32_1 = arith.constant 0 : i32
    return %c0_i32, %c0_i32_0 : i32, i32
  }
  func.func @transform_10(%arg0: i32, %arg1: i32) -> (i32, i32) {
    %c0_i32 = arith.constant 0 : i32
    %c0_i32_0 = arith.constant 0 : i32
    %c0_i32_1 = arith.constant 0 : i32
    return %c0_i32, %c0_i32_0 : i32, i32
  }
  func.func @transform_11(%arg0: i32, %arg1: i32) -> (i32, i32) {
    %c0_i32 = arith.constant 0 : i32
    %c0_i32_0 = arith.constant 0 : i32
    %c0_i32_1 = arith.constant 0 : i32
    return %c0_i32, %c0_i32_0 : i32, i32
  }
  func.func @transform_12(%arg0: i32, %arg1: i32) -> (i32, i32) {
    %c0_i32 = arith.constant 0 : i32
    %c0_i32_0 = arith.constant 0 : i32
    %c0_i32_1 = arith.constant 0 : i32
    return %c0_i32, %c0_i32_0 : i32, i32
  }
  func.func @transform_13(%arg0: i32, %arg1: i32) -> (i32, i32, i32) {
    %c0_i32 = arith.constant 0 : i32
    %c0_i32_0 = arith.constant 0 : i32
    return %arg0, %c0_i32, %arg1 : i32, i32, i32
  }
  func.func @transform_14(%arg0: i32, %arg1: i32) -> (i32, i32, i32) {
    %c0_i32 = arith.constant 0 : i32
    %c0_i32_0 = arith.constant 0 : i32
    return %arg0, %c0_i32, %arg1 : i32, i32, i32
  }
}

</mosaic_0001>

<llo_original>
// kernel: forward.1
$region0: #{forward.1}
  #allocation0 [shape = 'u32[]', space=smem, size = 0x4, offset = 0x4, fixed_abs, tag = 'smem constant byte address 0x4 - core index']
  #allocation1 [shape = 'u32[144,128]{1,0:T(1,128)}', space=vmem, size = 0x12000, scoped, tag = 'internal scratch']
  #allocation2 [shape = 'f32[2,128]{1,0:T(2,128)}', space=vmem, size = 0x400, scoped, tag = 'scratch operand']
  #allocation3 [shape = 's32[1]{0:T(128)S(6)}', space=smem, size = 0x200, scoped, tag = 'scoped memory for forward.1']
  %s0 = inlined_call_operand.vmem [shape: f32[2], index: 0, kind: input, shape index: {}]
  %s1 = inlined_call_operand.<no memory space> [shape: s32[1], index: 1, kind: input, shape index: {}]
  %s2 = inlined_call_operand.vmem [shape: f32[2,10,1], index: 2, kind: input, shape index: {}]
  %s3 = inlined_call_operand.vmem [shape: f32[2,1,10], index: 3, kind: input, shape index: {}]
  %s4 = inlined_call_operand.vmem [shape: f32[2,1,128], index: 4, kind: input, shape index: {}]
  %s5 = inlined_call_operand.vmem [shape: f32[8,2], index: 5, kind: input, shape index: {}]
  %s6 = inlined_call_operand.vmem [shape: f32[8,1], index: 6, kind: input, shape index: {}]
  %s7 = inlined_call_operand.vmem [shape: f32[80,8], index: 7, kind: input, shape index: {}]
  %s8 = inlined_call_operand.vmem [shape: f32[16,1], index: 8, kind: input, shape index: {}]
  %s9 = inlined_call_operand.vmem [shape: f32[40,16], index: 9, kind: input, shape index: {}]
  %s10 = inlined_call_operand.vmem [shape: f32[8,1], index: 10, kind: input, shape index: {}]
  %s11 = inlined_call_operand.vmem [shape: f32[2,8], index: 11, kind: input, shape index: {}]
  %s12 = inlined_call_operand.vmem [shape: f32[2,1], index: 12, kind: input, shape index: {}]
  %s13 = inlined_call_operand.vmem [shape: f32[2,1,128], index: 13, kind: output, shape index: {0}]
  %s14 = inlined_call_operand.vmem [shape: f32[2,1,128], index: 14, kind: output, shape index: {1}]
  %15 = xla_tuple %s13, %s14
  %s16 = sld [smem:[#allocation0]]
  $region101: #{forward.1} parent=0
    _
  %s18 = ssub.s32 1, %s16
  %s19 = scalar_select 0, %s18, %s16
  %20 = sst [smem:[#allocation3]] %s1
  $region1: #{forward.1} parent=0
    #allocation4 [shape = 'u8[512]{0}', space=smem, size = 0x200, scoped, tag = 'input window, operand 0, single buffered']
    #allocation5 [shape = 's32[2]{0}', space=sflag, size = 0x8, scoped, tag = 'scoped memory for forward.1']
    %21 = vsyncpa [#allocation5], 0
    loop: start=0, step=1, limit=4
    $region2: #{forward.1} parent=1 // loop_pre_header
      _
    $region3: #{forward.1} parent=1 // loop_header
      %s23 = sphi 0, %s27
      %p24 = scmp.ge.s32.totalorder %s23, 4
      %s30 = sphi 0, %s42
      %s31 = sphi 0, %s38
      %s32 = sphi 0, %s30
      %s33 = sphi 0, %s31
      %s34 = sphi 0, %s32
      %s35 = sphi 0, %s33
      %s43 = sphi 0, %s43
      %s45 = sphi 0, %s43
      %s46 = sphi 0, %s45
      %s60 = sphi 0, %s46
      %s64 = sphi 0, %s64
      %s66 = sphi 0, %s64
      %s67 = sphi 0, %s66
      %s81 = sphi 0, %s67
      %s87 = sphi 0, %s89
      %s90 = sphi 0, %s87
      %s91 = sphi 0, %s90
      %s107 = sphi 0, %s91
      %s113 = sphi 0, %s115
      %s116 = sphi 0, %s113
      %s117 = sphi 0, %s116
      %s133 = sphi 0, %s117
      %s141 = sphi 0, %s143
      %s144 = sphi 0, %s141
      %s145 = sphi 0, %s144
      %s161 = sphi 0, %s145
      %s165 = sphi 0, %s165
      %s167 = sphi 0, %s165
      %s168 = sphi 0, %s167
      %s182 = sphi 0, %s168
      %s186 = sphi 0, %s186
      %s188 = sphi 0, %s186
      %s189 = sphi 0, %s188
      %s203 = sphi 0, %s189
      %s207 = sphi 0, %s207
      %s209 = sphi 0, %s207
      %s210 = sphi 0, %s209
      %s224 = sphi 0, %s210
      %s228 = sphi 0, %s228
      %s230 = sphi 0, %s228
      %s231 = sphi 0, %s230
      %s245 = sphi 0, %s231
      %s249 = sphi 0, %s249
      %s251 = sphi 0, %s249
      %s252 = sphi 0, %s251
      %s266 = sphi 0, %s252
      %s270 = sphi 0, %s270
      %s272 = sphi 0, %s270
      %s273 = sphi 0, %s272
      %s287 = sphi 0, %s273
      %s291 = sphi 0, %s291
      %s293 = sphi 0, %s291
      %s294 = sphi 0, %s293
      %s308 = sphi 0, %s294
      %s312 = sphi 0, %s312
      %s314 = sphi 0, %s312
      %s315 = sphi 0, %s314
      %s329 = sphi 0, %s315
      %s337 = sphi 0, %s339
      %s340 = sphi 0, %s337
      %s341 = sphi 0, %s340
      %s357 = sphi 0, %s341
      %s365 = sphi 0, %s367
      %s368 = sphi 0, %s365
      %s369 = sphi 0, %s368
      %s385 = sphi 0, %s369
    $region4: #{forward.1} parent=1 // loop_header_branch
      %26 = sbr.rel (%p24) target = $region8
    $region5: #{forward.1} parent=1 // loop_body
      %s28 = ssub.s32 %s23, 1
      %s29 = ssub.s32 %s23, 2
      %s36 = sadd.s32 1, %s31
      %p37 = scmp.ge.s32.totalorder %s36, 1
      %s38 = scalar_select %p37, 0, %s36
      %s39 = sadd.s32 1, %s30
      %s40 = scalar_select %p37, %s39, %s30
      %p41 = scmp.ge.s32.totalorder %s40, 2
      %s42 = scalar_select %p41, 0, %s40
      %s44 = sadd.s32 %s43, 1
      %p47 = scmp.eq.s32.totalorder %s23, 1
      %p48 = scmp.ne.s32.totalorder %s43, %s45
      %p49 = scmp.eq.s32.totalorder %s23, 0
      %p50 = por %p48, %p49
      %p51 = scmp.ne.s32.totalorder %s43, %s45
      %p52 = scmp.eq.s32.totalorder %s28, 1
      %p53 = por %p51, %p52
      %p54 = scmp.ne.s32.totalorder %s45, %s46
      %p55 = scmp.eq.s32.totalorder %s28, 0
      %p56 = por %p54, %p55
      %p57 = scmp.ne.s32.totalorder %s45, %s46
      %p58 = scmp.eq.s32.totalorder %s29, 1
      %p59 = por %p57, %p58
      %p61 = scmp.ne.s32.totalorder %s46, %s60
      %p62 = scmp.eq.s32.totalorder %s29, 0
      %p63 = por %p61, %p62
      %s65 = sadd.s32 %s64, 1
      %p68 = scmp.eq.s32.totalorder %s23, 1
      %p69 = scmp.ne.s32.totalorder %s64, %s66
      %p70 = scmp.eq.s32.totalorder %s23, 0
      %p71 = por %p69, %p70
      %p72 = scmp.ne.s32.totalorder %s64, %s66
      %p73 = scmp.eq.s32.totalorder %s28, 1
      %p74 = por %p72, %p73
      %p75 = scmp.ne.s32.totalorder %s66, %s67
      %p76 = scmp.eq.s32.totalorder %s28, 0
      %p77 = por %p75, %p76
      %p78 = scmp.ne.s32.totalorder %s66, %s67
      %p79 = scmp.eq.s32.totalorder %s29, 1
      %p80 = por %p78, %p79
      %p82 = scmp.ne.s32.totalorder %s67, %s81
      %p83 = scmp.eq.s32.totalorder %s29, 0
      %p84 = por %p82, %p83
      %s85 = ssub.s32 %s30, %s42
      %p86 = scmp.eq.s32.totalorder %s85, 0
      %s88 = sadd.s32 %s87, 1
      %s89 = scalar_select %p86, %s87, %s88
      %p92 = pneg %p86
      %p93 = scmp.eq.s32.totalorder %s23, 1
      %p94 = por %p92, %p93
      %p95 = scmp.ne.s32.totalorder %s87, %s90
      %p96 = scmp.eq.s32.totalorder %s23, 0
      %p97 = por %p95, %p96
      %p98 = scmp.ne.s32.totalorder %s87, %s90
      %p99 = scmp.eq.s32.totalorder %s28, 1
      %p100 = por %p98, %p99
      %p101 = scmp.ne.s32.totalorder %s90, %s91
      %p102 = scmp.eq.s32.totalorder %s28, 0
      %p103 = por %p101, %p102
      %p104 = scmp.ne.s32.totalorder %s90, %s91
      %p105 = scmp.eq.s32.totalorder %s29, 1
      %p106 = por %p104, %p105
      %p108 = scmp.ne.s32.totalorder %s91, %s107
      %p109 = scmp.eq.s32.totalorder %s29, 0
      %p110 = por %p108, %p109
      %s111 = ssub.s32 %s30, %s42
      %p112 = scmp.eq.s32.totalorder %s111, 0
      %s114 = sadd.s32 %s113, 1
      %s115 = scalar_select %p112, %s113, %s114
      %p118 = pneg %p112
      %p119 = scmp.eq.s32.totalorder %s23, 1
      %p120 = por %p118, %p119
      %p121 = scmp.ne.s32.totalorder %s113, %s116
      %p122 = scmp.eq.s32.totalorder %s23, 0
      %p123 = por %p121, %p122
      %p124 = scmp.ne.s32.totalorder %s113, %s116
      %p125 = scmp.eq.s32.totalorder %s28, 1
      %p126 = por %p124, %p125
      %p127 = scmp.ne.s32.totalorder %s116, %s117
      %p128 = scmp.eq.s32.totalorder %s28, 0
      %p129 = por %p127, %p128
      %p130 = scmp.ne.s32.totalorder %s116, %s117
      %p131 = scmp.eq.s32.totalorder %s29, 1
      %p132 = por %p130, %p131
      %p134 = scmp.ne.s32.totalorder %s117, %s133
      %p135 = scmp.eq.s32.totalorder %s29, 0
      %p136 = por %p134, %p135
      %s137 = ssub.s32 %s30, %s42
      %s138 = ssub.s32 %s31, %s38
      %s139 = sor.u32 %s137, %s138
      %p140 = scmp.eq.s32.totalorder %s139, 0
      %s142 = sadd.s32 %s141, 1
      %s143 = scalar_select %p140, %s141, %s142
      %p146 = pneg %p140
      %p147 = scmp.eq.s32.totalorder %s23, 1
      %p148 = por %p146, %p147
      %p149 = scmp.ne.s32.totalorder %s141, %s144
      %p150 = scmp.eq.s32.totalorder %s23, 0
      %p151 = por %p149, %p150
      %p152 = scmp.ne.s32.totalorder %s141, %s144
      %p153 = scmp.eq.s32.totalorder %s28, 1
      %p154 = por %p152, %p153
      %p155 = scmp.ne.s32.totalorder %s144, %s145
      %p156 = scmp.eq.s32.totalorder %s28, 0
      %p157 = por %p155, %p156
      %p158 = scmp.ne.s32.totalorder %s144, %s145
      %p159 = scmp.eq.s32.totalorder %s29, 1
      %p160 = por %p158, %p159
      %p162 = scmp.ne.s32.totalorder %s145, %s161
      %p163 = scmp.eq.s32.totalorder %s29, 0
      %p164 = por %p162, %p163
      %s166 = sadd.s32 %s165, 1
      %p169 = scmp.eq.s32.totalorder %s23, 1
      %p170 = scmp.ne.s32.totalorder %s165, %s167
      %p171 = scmp.eq.s32.totalorder %s23, 0
      %p172 = por %p170, %p171
      %p173 = scmp.ne.s32.totalorder %s165, %s167
      %p174 = scmp.eq.s32.totalorder %s28, 1
      %p175 = por %p173, %p174
      %p176 = scmp.ne.s32.totalorder %s167, %s168
      %p177 = scmp.eq.s32.totalorder %s28, 0
      %p178 = por %p176, %p177
      %p179 = scmp.ne.s32.totalorder %s167, %s168
      %p180 = scmp.eq.s32.totalorder %s29, 1
      %p181 = por %p179, %p180
      %p183 = scmp.ne.s32.totalorder %s168, %s182
      %p184 = scmp.eq.s32.totalorder %s29, 0
      %p185 = por %p183, %p184
      %s187 = sadd.s32 %s186, 1
      %p190 = scmp.eq.s32.totalorder %s23, 1
      %p191 = scmp.ne.s32.totalorder %s186, %s188
      %p192 = scmp.eq.s32.totalorder %s23, 0
      %p193 = por %p191, %p192
      %p194 = scmp.ne.s32.totalorder %s186, %s188
      %p195 = scmp.eq.s32.totalorder %s28, 1
      %p196 = por %p194, %p195
      %p197 = scmp.ne.s32.totalorder %s188, %s189
      %p198 = scmp.eq.s32.totalorder %s28, 0
      %p199 = por %p197, %p198
      %p200 = scmp.ne.s32.totalorder %s188, %s189
      %p201 = scmp.eq.s32.totalorder %s29, 1
      %p202 = por %p200, %p201
      %p204 = scmp.ne.s32.totalorder %s189, %s203
      %p205 = scmp.eq.s32.totalorder %s29, 0
      %p206 = por %p204, %p205
      %s208 = sadd.s32 %s207, 1
      %p211 = scmp.eq.s32.totalorder %s23, 1
      %p212 = scmp.ne.s32.totalorder %s207, %s209
      %p213 = scmp.eq.s32.totalorder %s23, 0
      %p214 = por %p212, %p213
      %p215 = scmp.ne.s32.totalorder %s207, %s209
      %p216 = scmp.eq.s32.totalorder %s28, 1
      %p217 = por %p215, %p216
      %p218 = scmp.ne.s32.totalorder %s209, %s210
      %p219 = scmp.eq.s32.totalorder %s28, 0
      %p220 = por %p218, %p219
      %p221 = scmp.ne.s32.totalorder %s209, %s210
      %p222 = scmp.eq.s32.totalorder %s29, 1
      %p223 = por %p221, %p222
      %p225 = scmp.ne.s32.totalorder %s210, %s224
      %p226 = scmp.eq.s32.totalorder %s29, 0
      %p227 = por %p225, %p226
      %s229 = sadd.s32 %s228, 1
      %p232 = scmp.eq.s32.totalorder %s23, 1
      %p233 = scmp.ne.s32.totalorder %s228, %s230
      %p234 = scmp.eq.s32.totalorder %s23, 0
      %p235 = por %p233, %p234
      %p236 = scmp.ne.s32.totalorder %s228, %s230
      %p237 = scmp.eq.s32.totalorder %s28, 1
      %p238 = por %p236, %p237
      %p239 = scmp.ne.s32.totalorder %s230, %s231
      %p240 = scmp.eq.s32.totalorder %s28, 0
      %p241 = por %p239, %p240
      %p242 = scmp.ne.s32.totalorder %s230, %s231
      %p243 = scmp.eq.s32.totalorder %s29, 1
      %p244 = por %p242, %p243
      %p246 = scmp.ne.s32.totalorder %s231, %s245
      %p247 = scmp.eq.s32.totalorder %s29, 0
      %p248 = por %p246, %p247
      %s250 = sadd.s32 %s249, 1
      %p253 = scmp.eq.s32.totalorder %s23, 1
      %p254 = scmp.ne.s32.totalorder %s249, %s251
      %p255 = scmp.eq.s32.totalorder %s23, 0
      %p256 = por %p254, %p255
      %p257 = scmp.ne.s32.totalorder %s249, %s251
      %p258 = scmp.eq.s32.totalorder %s28, 1
      %p259 = por %p257, %p258
      %p260 = scmp.ne.s32.totalorder %s251, %s252
      %p261 = scmp.eq.s32.totalorder %s28, 0
      %p262 = por %p260, %p261
      %p263 = scmp.ne.s32.totalorder %s251, %s252
      %p264 = scmp.eq.s32.totalorder %s29, 1
      %p265 = por %p263, %p264
      %p267 = scmp.ne.s32.totalorder %s252, %s266
      %p268 = scmp.eq.s32.totalorder %s29, 0
      %p269 = por %p267, %p268
      %s271 = sadd.s32 %s270, 1
      %p274 = scmp.eq.s32.totalorder %s23, 1
      %p275 = scmp.ne.s32.totalorder %s270, %s272
      %p276 = scmp.eq.s32.totalorder %s23, 0
      %p277 = por %p275, %p276
      %p278 = scmp.ne.s32.totalorder %s270, %s272
      %p279 = scmp.eq.s32.totalorder %s28, 1
      %p280 = por %p278, %p279
      %p281 = scmp.ne.s32.totalorder %s272, %s273
      %p282 = scmp.eq.s32.totalorder %s28, 0
      %p283 = por %p281, %p282
      %p284 = scmp.ne.s32.totalorder %s272, %s273
      %p285 = scmp.eq.s32.totalorder %s29, 1
      %p286 = por %p284, %p285
      %p288 = scmp.ne.s32.totalorder %s273, %s287
      %p289 = scmp.eq.s32.totalorder %s29, 0
      %p290 = por %p288, %p289
      %s292 = sadd.s32 %s291, 1
      %p295 = scmp.eq.s32.totalorder %s23, 1
      %p296 = scmp.ne.s32.totalorder %s291, %s293
      %p297 = scmp.eq.s32.totalorder %s23, 0
      %p298 = por %p296, %p297
      %p299 = scmp.ne.s32.totalorder %s291, %s293
      %p300 = scmp.eq.s32.totalorder %s28, 1
      %p301 = por %p299, %p300
      %p302 = scmp.ne.s32.totalorder %s293, %s294
      %p303 = scmp.eq.s32.totalorder %s28, 0
      %p304 = por %p302, %p303
      %p305 = scmp.ne.s32.totalorder %s293, %s294
      %p306 = scmp.eq.s32.totalorder %s29, 1
      %p307 = por %p305, %p306
      %p309 = scmp.ne.s32.totalorder %s294, %s308
      %p310 = scmp.eq.s32.totalorder %s29, 0
      %p311 = por %p309, %p310
      %s313 = sadd.s32 %s312, 1
      %p316 = scmp.eq.s32.totalorder %s23, 1
      %p317 = scmp.ne.s32.totalorder %s312, %s314
      %p318 = scmp.eq.s32.totalorder %s23, 0
      %p319 = por %p317, %p318
      %p320 = scmp.ne.s32.totalorder %s312, %s314
      %p321 = scmp.eq.s32.totalorder %s28, 1
      %p322 = por %p320, %p321
      %p323 = scmp.ne.s32.totalorder %s314, %s315
      %p324 = scmp.eq.s32.totalorder %s28, 0
      %p325 = por %p323, %p324
      %p326 = scmp.ne.s32.totalorder %s314, %s315
      %p327 = scmp.eq.s32.totalorder %s29, 1
      %p328 = por %p326, %p327
      %p330 = scmp.ne.s32.totalorder %s315, %s329
      %p331 = scmp.eq.s32.totalorder %s29, 0
      %p332 = por %p330, %p331
      %s333 = ssub.s32 %s30, %s42
      %s334 = ssub.s32 %s31, %s38
      %s335 = sor.u32 %s333, %s334
      %p336 = scmp.eq.s32.totalorder %s335, 0
      %s338 = sadd.s32 %s337, 1
      %s339 = scalar_select %p336, %s337, %s338
      %p342 = pneg %p336
      %p343 = scmp.eq.s32.totalorder %s23, 1
      %p344 = por %p342, %p343
      %p345 = scmp.ne.s32.totalorder %s337, %s340
      %p346 = scmp.eq.s32.totalorder %s23, 0
      %p347 = por %p345, %p346
      %p348 = scmp.ne.s32.totalorder %s337, %s340
      %p349 = scmp.eq.s32.totalorder %s28, 1
      %p350 = por %p348, %p349
      %p351 = scmp.ne.s32.totalorder %s340, %s341
      %p352 = scmp.eq.s32.totalorder %s28, 0
      %p353 = por %p351, %p352
      %p354 = scmp.ne.s32.totalorder %s340, %s341
      %p355 = scmp.eq.s32.totalorder %s29, 1
      %p356 = por %p354, %p355
      %p358 = scmp.ne.s32.totalorder %s341, %s357
      %p359 = scmp.eq.s32.totalorder %s29, 0
      %p360 = por %p358, %p359
      %s361 = ssub.s32 %s30, %s42
      %s362 = ssub.s32 %s31, %s38
      %s363 = sor.u32 %s361, %s362
      %p364 = scmp.eq.s32.totalorder %s363, 0
      %s366 = sadd.s32 %s365, 1
      %s367 = scalar_select %p364, %s365, %s366
      %p370 = pneg %p364
      %p371 = scmp.eq.s32.totalorder %s23, 1
      %p372 = por %p370, %p371
      %p373 = scmp.ne.s32.totalorder %s365, %s368
      %p374 = scmp.eq.s32.totalorder %s23, 0
      %p375 = por %p373, %p374
      %p376 = scmp.ne.s32.totalorder %s365, %s368
      %p377 = scmp.eq.s32.totalorder %s28, 1
      %p378 = por %p376, %p377
      %p379 = scmp.ne.s32.totalorder %s368, %s369
      %p380 = scmp.eq.s32.totalorder %s28, 0
      %p381 = por %p379, %p380
      %p382 = scmp.ne.s32.totalorder %s368, %s369
      %p383 = scmp.eq.s32.totalorder %s29, 1
      %p384 = por %p382, %p383
      %p386 = scmp.ne.s32.totalorder %s369, %s385
      %p387 = scmp.eq.s32.totalorder %s29, 0
      %p388 = por %p386, %p387
      %p389 = scmp.le.s32.totalorder 1, %s23
      %p390 = scmp.lt.s32.totalorder %s23, 3
      %p391 = pnand %p389, %p390
      %p392 = pneg %p391
      // Predicated region
      $region9: #{forward.1} parent=5 // pred_check
        _
      $region10: #{forward.1} parent=5 // pred_check_branch
        %394 = sbr.rel (%p391) target = $region12
      $region11: #{forward.1} parent=5 // pred_region
        %s395 = ssub.s32 %s23, 1
        // Predicated region
        $region13: #{forward.1} parent=11 // pred_check
          %p396 = pneg %p56
        $region14: #{forward.1} parent=11 // pred_check_branch
          %398 = sbr.rel (%p396) target = $region16
        $region15: #{forward.1} parent=11 // pred_region
          %s400 = ssub.s32 16, 16
          %401 = vsyncadd [#allocation5], %s400
          %s403 = sshll.u32 %s0, 4
          %s404 = int_to_ptr.vmem [resolvable:$true] %s403
          %406 = dma.vmem_to_smem %s404, 16, [#allocation4], [#allocation5]
        $region16: #{forward.1} parent=11 // pred_fallthru
          _
        // Predicated region
        $region17: #{forward.1} parent=11 // pred_check
          %p407 = pneg %p77
        $region18: #{forward.1} parent=11 // pred_check_branch
          %409 = sbr.rel (%p407) target = $region20
        $region19: #{forward.1} parent=11 // pred_region
          _
        $region20: #{forward.1} parent=11 // pred_fallthru
          _
        // Predicated region
        $region21: #{forward.1} parent=11 // pred_check
          %p410 = pneg %p178
        $region22: #{forward.1} parent=11 // pred_check_branch
          %412 = sbr.rel (%p410) target = $region24
        $region23: #{forward.1} parent=11 // pred_region
          _
        $region24: #{forward.1} parent=11 // pred_fallthru
          _
        // Predicated region
        $region25: #{forward.1} parent=11 // pred_check
          %p413 = pneg %p199
        $region26: #{forward.1} parent=11 // pred_check_branch
          %415 = sbr.rel (%p413) target = $region28
        $region27: #{forward.1} parent=11 // pred_region
          _
        $region28: #{forward.1} parent=11 // pred_fallthru
          _
        // Predicated region
        $region29: #{forward.1} parent=11 // pred_check
          %p416 = pneg %p220
        $region30: #{forward.1} parent=11 // pred_check_branch
          %418 = sbr.rel (%p416) target = $region32
        $region31: #{forward.1} parent=11 // pred_region
          _
        $region32: #{forward.1} parent=11 // pred_fallthru
          _
        // Predicated region
        $region33: #{forward.1} parent=11 // pred_check
          %p419 = pneg %p241
        $region34: #{forward.1} parent=11 // pred_check_branch
          %421 = sbr.rel (%p419) target = $region36
        $region35: #{forward.1} parent=11 // pred_region
          _
        $region36: #{forward.1} parent=11 // pred_fallthru
          _
        // Predicated region
        $region37: #{forward.1} parent=11 // pred_check
          %p422 = pneg %p262
        $region38: #{forward.1} parent=11 // pred_check_branch
          %424 = sbr.rel (%p422) target = $region40
        $region39: #{forward.1} parent=11 // pred_region
          _
        $region40: #{forward.1} parent=11 // pred_fallthru
          _
        // Predicated region
        $region41: #{forward.1} parent=11 // pred_check
          %p425 = pneg %p283
        $region42: #{forward.1} parent=11 // pred_check_branch
          %427 = sbr.rel (%p425) target = $region44
        $region43: #{forward.1} parent=11 // pred_region
          _
        $region44: #{forward.1} parent=11 // pred_fallthru
          _
        // Predicated region
        $region45: #{forward.1} parent=11 // pred_check
          %p428 = pneg %p304
        $region46: #{forward.1} parent=11 // pred_check_branch
          %430 = sbr.rel (%p428) target = $region48
        $region47: #{forward.1} parent=11 // pred_region
          _
        $region48: #{forward.1} parent=11 // pred_fallthru
          _
        // Predicated region
        $region49: #{forward.1} parent=11 // pred_check
          %p431 = pneg %p325
        $region50: #{forward.1} parent=11 // pred_check_branch
          %433 = sbr.rel (%p431) target = $region52
        $region51: #{forward.1} parent=11 // pred_region
          _
        $region52: #{forward.1} parent=11 // pred_fallthru
          _
      $region12: #{forward.1} parent=5 // pred_fallthru
        _
      %p434 = scmp.lt.s32.totalorder %s23, 2
      // Predicated region
      $region53: #{forward.1} parent=5 // pred_check
        %p435 = pneg %p434
      $region54: #{forward.1} parent=5 // pred_check_branch
        %437 = sbr.rel (%p435) target = $region56
      $region55: #{forward.1} parent=5 // pred_region
        // Predicated region
        $region57: #{forward.1} parent=55 // pred_check
          %p438 = pneg %p97
        $region58: #{forward.1} parent=55 // pred_check_branch
          %440 = sbr.rel (%p438) target = $region60
        $region59: #{forward.1} parent=55 // pred_region
          %p441 = scmp.lt.s32.totalorder %s30, 1
          %s442 = scalar_select %p441, %s30, 1
          %s443 = smul.addr %s442, 2
          %s444 = smul.addr %s443, 8
          %s445 = scalar_lea.vmem %s2, %s444
        $region60: #{forward.1} parent=55 // pred_fallthru
          _
        // Predicated region
        $region61: #{forward.1} parent=55 // pred_check
          %p446 = pneg %p123
        $region62: #{forward.1} parent=55 // pred_check_branch
          %448 = sbr.rel (%p446) target = $region64
        $region63: #{forward.1} parent=55 // pred_region
          %p449 = scmp.lt.s32.totalorder %s30, 1
          %s450 = scalar_select %p449, %s30, 1
          %s451 = scalar_lea.vmem %s3, %s450
        $region64: #{forward.1} parent=55 // pred_fallthru
          _
        // Predicated region
        $region65: #{forward.1} parent=55 // pred_check
          %p452 = pneg %p151
        $region66: #{forward.1} parent=55 // pred_check_branch
          %454 = sbr.rel (%p452) target = $region68
        $region67: #{forward.1} parent=55 // pred_region
          %p455 = scmp.lt.s32.totalorder %s30, 1
          %s456 = scalar_select %p455, %s30, 1
          %p457 = scmp.lt.s32.totalorder %s31, 0
          %s458 = scalar_select %p457, %s31, 0
          %s459 = sadd.s32 %s458, %s456
          %s460 = scalar_lea.vmem %s4, %s459
        $region68: #{forward.1} parent=55 // pred_fallthru
          _
      $region56: #{forward.1} parent=5 // pred_fallthru
        _
      %p461 = scmp.le.s32.totalorder 1, %s23
      %p462 = scmp.lt.s32.totalorder %s23, 3
      %p463 = pnand %p461, %p462
      %p464 = pneg %p463
      // Predicated region
      $region69: #{forward.1} parent=5 // pred_check
        _
      $region70: #{forward.1} parent=5 // pred_check_branch
        %466 = sbr.rel (%p463) target = $region72
      $region71: #{forward.1} parent=5 // pred_region
        %s467 = ssub.s32 %s23, 1
        // Predicated region
        $region73: #{forward.1} parent=71 // pred_check
          %p468 = pneg %p56
        $region74: #{forward.1} parent=71 // pred_check_branch
          %470 = sbr.rel (%p468) target = $region76
        $region75: #{forward.1} parent=71 // pred_region
          %471 = dma.done [#allocation5], 16
        $region76: #{forward.1} parent=71 // pred_fallthru
          _
        %472 = sfence
        %p473 = pneg %p56
        %p474 = pneg %p53
        %p475 = pneg %p77
        %p476 = pneg %p74
        %p477 = scmp.lt.s32.totalorder %s32, 1
        %s478 = scalar_select %p477, %s32, 1
        %s479 = smul.addr %s478, 2
        %s480 = smul.addr %s479, 8
        %s481 = scalar_lea.vmem %s2, %s480
        %p482 = pneg %p103
        %p483 = pneg %p100
        %p484 = scmp.lt.s32.totalorder %s32, 1
        %s485 = scalar_select %p484, %s32, 1
        %s486 = scalar_lea.vmem %s3, %s485
        %p487 = pneg %p129
        %p488 = pneg %p126
        %p489 = scmp.lt.s32.totalorder %s32, 1
        %s490 = scalar_select %p489, %s32, 1
        %p491 = scmp.lt.s32.totalorder %s33, 0
        %s492 = scalar_select %p491, %s33, 0
        %s493 = sadd.s32 %s492, %s490
        %s494 = scalar_lea.vmem %s4, %s493
        %p495 = pneg %p157
        %p496 = pneg %p154
        %p497 = pneg %p178
        %p498 = pneg %p175
        %p499 = pneg %p199
        %p500 = pneg %p196
        %p501 = pneg %p220
        %p502 = pneg %p217
        %p503 = pneg %p241
        %p504 = pneg %p238
        %p505 = pneg %p262
        %p506 = pneg %p259
        %p507 = pneg %p283
        %p508 = pneg %p280
        %p509 = pneg %p304
        %p510 = pneg %p301
        %p511 = pneg %p325
        %p512 = pneg %p322
        %p513 = pneg %p353
        %p514 = pneg %p350
        %p515 = scmp.lt.s32.totalorder %s32, 1
        %s516 = scalar_select %p515, %s32, 1
        %p517 = scmp.lt.s32.totalorder %s33, 0
        %s518 = scalar_select %p517, %s33, 0
        %s519 = sadd.s32 %s518, %s516
        %s520 = scalar_lea.vmem %s13, %s519
        %p521 = pneg %p381
        %p522 = pneg %p378
        %p523 = scmp.lt.s32.totalorder %s32, 1
        %s524 = scalar_select %p523, %s32, 1
        %p525 = scmp.lt.s32.totalorder %s33, 0
        %s526 = scalar_select %p525, %s33, 0
        %s527 = sadd.s32 %s526, %s524
        %s528 = scalar_lea.vmem %s14, %s527
        %p529 = scmp.lt.s32.totalorder %s32, 1
        %s530 = scalar_select %p529, %s32, 1
        %s531 = smul.addr %s530, 2
        %s532 = smul.addr %s531, 8
        %s533 = scalar_lea.vmem %s2, %s532
        %p534 = scmp.lt.s32.totalorder %s32, 1
        %s535 = scalar_select %p534, %s32, 1
        %s536 = scalar_lea.vmem %s3, %s535
        %p537 = scmp.lt.s32.totalorder %s32, 1
        %s538 = scalar_select %p537, %s32, 1
        %p539 = scmp.lt.s32.totalorder %s33, 0
        %s540 = scalar_select %p539, %s33, 0
        %s541 = sadd.s32 %s540, %s538
        %s542 = scalar_lea.vmem %s4, %s541
        %p543 = scmp.lt.s32.totalorder %s32, 1
        %s544 = scalar_select %p543, %s32, 1
        %p545 = scmp.lt.s32.totalorder %s33, 0
        %s546 = scalar_select %p545, %s33, 0
        %s547 = sadd.s32 %s546, %s544
        %s548 = scalar_lea.vmem %s13, %s547
        %p549 = scmp.lt.s32.totalorder %s32, 1
        %s550 = scalar_select %p549, %s32, 1
        %p551 = scmp.lt.s32.totalorder %s33, 0
        %s552 = scalar_select %p551, %s33, 0
        %s553 = sadd.s32 %s552, %s550
        %s554 = scalar_lea.vmem %s14, %s553
        %s556 = sld [smem:[#allocation4]]
        %s557 = sld [smem:[#allocation4 + $0x1]]
        %p558 = scmp.eq.s32.totalorder %s33, 0
        // Predicated region
        $region77: #{forward.1} parent=71 // pred_check
          %p559 = pneg %p558
        $region78: #{forward.1} parent=71 // pred_check_branch
          %561 = sbr.rel (%p559) target = $region80
        $region79: #{forward.1} parent=71 // pred_region
          %s562 = sld [smem:[#allocation3]]
          %v563 = vld [vmem:[%s533] sm:$0xff]
          %v564 = vld [vmem:[%s533 + $0x8] sm:$0x3]
          %v565 = vld [vmem:[%s536] sm:$0x1]
          %v566 = vlaneseq
          %v567 = vand.u32 %v566, 127
          %v568 = vcvt.s32.f32 %v567
          %v569 = vstv %s557
          %v570 = vmul.f32 %v568, %v569
          %v571 = vstv %s556
          %v572 = vadd.f32 %v571, %v570
          %v573 = vstv %s562
          %vm574 = vcmp.lt.s32.totalorder %v567, %v573
          %576 = vset.pattern.permute.xlu0 0
          %577 = vperm.xlu0 %576, %v563
          %v578 = vpop.permute.xlu0 %577
          %581 = vset.pattern.permute.xlu0 0
          %582 = vperm.xlu0 %581, %v564
          %v583 = vpop.permute.xlu0 %582
          %v585 = vsub.f32 %v578, %v572
          %v586 = vsub.f32 %v583, %v572
          %v587 = vmul.f32 %v585, %v585
          %v588 = vmul.f32 %v586, %v586
          %v589 = vsub.f32 0.0, %v587
          %v590 = vsub.f32 0.0, %v588
          %v591 = vmul.f32 %v589, 1.442695
          %v592 = vpow.pop %v591
          %v593 = vmul.f32 %v590, 1.442695
          %v594 = vpow.pop %v593
          %v596 = vlaneseq
          %v597 = vshrl.u32 %v596, 7
          %v598 = vsub.s32 0, %v597
          %v599 = vrot.slane %v565, %v598
          %vm601 = vcmask 1040384
          %v602 = vsel %vm601, 1.0, %v599
          %vm603 = vcmask 80896
          %v605 = vsel %vm603, %v602, 0
          %vm607 = vcmask 1041408
          %v609 = vsel %vm607, %v594, 0
          %611 = vmatprep.subr.mxu0 0.0
          %612 = vmatpush1.msra.mxu0 %v592
          %613 = vmatprep.subr.mxu0 0.0
          %614 = vmatpush1.msra.mxu0 %v609
          %615 = vmatprep.subr.mxu0 0.0
          %616 = vmatpush1.msra.mxu0 0.0
          %617 = vmatprep.subr.mxu0 0.0
          %618 = vmatpush1.msra.mxu0 0.0
          %619 = vmatprep.subr.mxu0 0.0
          %620 = vmatpush1.msra.mxu0 0.0
          %621 = vmatprep.subr.mxu0 0.0
          %622 = vmatpush1.msra.mxu0 0.0
          %623 = vmatprep.subr.mxu0 0.0
          %624 = vmatpush1.msra.mxu0 0.0
          %625 = vmatprep.subr.mxu0 0.0
          %626 = vmatpush1.msra.mxu0 0.0
          %627 = vmatprep.subr.mxu0 0.0
          %628 = vmatpush1.msra.mxu0 0.0
          %629 = vmatprep.subr.mxu0 0.0
          %630 = vmatpush1.msra.mxu0 0.0
          %631 = vmatprep.subr.mxu0 0.0
          %632 = vmatpush1.msra.mxu0 0.0
          %633 = vmatprep.subr.mxu0 0.0
          %634 = vmatpush1.msra.mxu0 0.0
          %635 = vmatprep.subr.mxu0 0.0
          %636 = vmatpush1.msra.mxu0 0.0
          %637 = vmatprep.subr.mxu0 0.0
          %638 = vmatpush1.msra.mxu0 0.0
          %639 = vmatprep.subr.mxu0 0.0
          %640 = vmatpush1.msra.mxu0 0.0
          %641 = vmatprep.subr.mxu0 0.0
          %642 = vmatpush1.msra.mxu0 0.0
          %643 = vmatprep.subr.mxu0 0.0
          %644 = vmatpush1.msra.mxu0 0.0
          %645 = vmatprep.subr.mxu0 0.0
          %646 = vmatpush1.msra.mxu0 0.0
          %647 = vmatprep.subr.mxu0 0.0
          %648 = vmatpush1.msra.mxu0 0.0
          %649 = vmatprep.subr.mxu0 0.0
          %650 = vmatpush1.msra.mxu0 0.0
          %651 = vmatprep.subr.mxu0 0.0
          %652 = vmatpush1.msra.mxu0 0.0
          %653 = vmatprep.subr.mxu0 0.0
          %654 = vmatpush1.msra.mxu0 0.0
          %655 = vmatprep.subr.mxu0 0.0
          %656 = vmatpush1.msra.mxu0 0.0
          %657 = vmatprep.subr.mxu0 0.0
          %658 = vmatpush1.msra.mxu0 0.0
          %659 = vmatprep.subr.mxu0 0.0
          %660 = vmatpush1.msra.mxu0 0.0
          %661 = vmatprep.subr.mxu0 0.0
          %662 = vmatpush1.msra.mxu0 0.0
          %663 = vmatprep.subr.mxu0 0.0
          %664 = vmatpush1.msra.mxu0 0.0
          %665 = vmatprep.subr.mxu0 0.0
          %666 = vmatpush1.msra.mxu0 0.0
          %667 = vmatprep.subr.mxu0 0.0
          %668 = vmatpush1.msra.mxu0 0.0
          %669 = vmatprep.subr.mxu0 0.0
          %670 = vmatpush1.msra.mxu0 0.0
          %671 = vmatprep.subr.mxu0 0.0
          %672 = vmatpush1.msra.mxu0 0.0
          %673 = vmatprep.subr.mxu0 0.0
          %674 = vmatpush1.msra.mxu0 0.0
          %675 = vmatprep.mubr.f32.mxu0 0.0
          %676 = vmatmul.mubr.f32.gmra.mrb[0].mxu0 %v605
          %v677 = vpop.f32.mrb[0].mxu0
          %v678 = vadd.f32 0.0, %v677
          %v679 = vpop.f32.mrb[0].mxu0
          %680 = vdwg.mxu0
          %v681 = vadd.f32 %v678, 1e-08
          %v682 = vrcp.pop %v681
          %v684 = vrot.slane %v682, 7
          %v686 = vmul.f32 %v678, %v684
          %v687 = vsel %vm601, %v678, %v686
          %v688 = vld [vmem:[%s5] sm:$0xff]
          %v689 = vld [vmem:[%s6] sm:$0xff]
          %691 = vset.pattern.permute.xlu0 0
          %692 = vperm.xlu0 %691, %v689
          %v693 = vpop.permute.xlu0 %692
          %vm695 = vcmask 15360
          %v697 = vsel %vm695, %v688, 0
          %v700 = vsel %vm607, %v687, 0
          %702 = vmatprep.subr.mxu0 0.0
          %703 = vmatpush1.msra.mxu0 %v700
          %704 = vmatprep.subr.mxu0 0.0
          %705 = vmatpush1.msra.mxu0 0.0
          %706 = vmatprep.subr.mxu0 0.0
          %707 = vmatpush1.msra.mxu0 0.0
          %708 = vmatprep.subr.mxu0 0.0
          %709 = vmatpush1.msra.mxu0 0.0
          %710 = vmatprep.subr.mxu0 0.0
          %711 = vmatpush1.msra.mxu0 0.0
          %712 = vmatprep.subr.mxu0 0.0
          %713 = vmatpush1.msra.mxu0 0.0
          %714 = vmatprep.subr.mxu0 0.0
          %715 = vmatpush1.msra.mxu0 0.0
          %716 = vmatprep.subr.mxu0 0.0
          %717 = vmatpush1.msra.mxu0 0.0
          %718 = vmatprep.subr.mxu0 0.0
          %719 = vmatpush1.msra.mxu0 0.0
          %720 = vmatprep.subr.mxu0 0.0
          %721 = vmatpush1.msra.mxu0 0.0
          %722 = vmatprep.subr.mxu0 0.0
          %723 = vmatpush1.msra.mxu0 0.0
          %724 = vmatprep.subr.mxu0 0.0
          %725 = vmatpush1.msra.mxu0 0.0
          %726 = vmatprep.subr.mxu0 0.0
          %727 = vmatpush1.msra.mxu0 0.0
          %728 = vmatprep.subr.mxu0 0.0
          %729 = vmatpush1.msra.mxu0 0.0
          %730 = vmatprep.subr.mxu0 0.0
          %731 = vmatpush1.msra.mxu0 0.0
          %732 = vmatprep.subr.mxu0 0.0
          %733 = vmatpush1.msra.mxu0 0.0
          %734 = vmatprep.subr.mxu0 0.0
          %735 = vmatpush1.msra.mxu0 0.0
          %736 = vmatprep.subr.mxu0 0.0
          %737 = vmatpush1.msra.mxu0 0.0
          %738 = vmatprep.subr.mxu0 0.0
          %739 = vmatpush1.msra.mxu0 0.0
          %740 = vmatprep.subr.mxu0 0.0
          %741 = vmatpush1.msra.mxu0 0.0
          %742 = vmatprep.subr.mxu0 0.0
          %743 = vmatpush1.msra.mxu0 0.0
          %744 = vmatprep.subr.mxu0 0.0
          %745 = vmatpush1.msra.mxu0 0.0
          %746 = vmatprep.subr.mxu0 0.0
          %747 = vmatpush1.msra.mxu0 0.0
          %748 = vmatprep.subr.mxu0 0.0
          %749 = vmatpush1.msra.mxu0 0.0
          %750 = vmatprep.subr.mxu0 0.0
          %751 = vmatpush1.msra.mxu0 0.0
          %752 = vmatprep.subr.mxu0 0.0
          %753 = vmatpush1.msra.mxu0 0.0
          %754 = vmatprep.subr.mxu0 0.0
          %755 = vmatpush1.msra.mxu0 0.0
          %756 = vmatprep.subr.mxu0 0.0
          %757 = vmatpush1.msra.mxu0 0.0
          %758 = vmatprep.subr.mxu0 0.0
          %759 = vmatpush1.msra.mxu0 0.0
          %760 = vmatprep.subr.mxu0 0.0
          %761 = vmatpush1.msra.mxu0 0.0
          %762 = vmatprep.subr.mxu0 0.0
          %763 = vmatpush1.msra.mxu0 0.0
          %764 = vmatprep.subr.mxu0 0.0
          %765 = vmatpush1.msra.mxu0 0.0
          %766 = vmatprep.mubr.f32.mxu0 0.0
          %767 = vmatmul.mubr.f32.gmra.mrb[0].mxu0 %v697
          %v768 = vpop.f32.mrb[0].mxu0
          %v769 = vadd.f32 %v693, %v768
          %v770 = vpop.f32.mrb[0].mxu0
          %771 = vdwg.mxu0
          %v772 = vxor.u32 %v769, 2147483648
          %v773 = vmul.f32 %v772, 1.442695
          %v774 = vpow.pop %v773
          %v775 = vadd.f32 %v774, 1.0
          %v776 = vrcp.pop %v775
          %v777 = vmul.f32 1.0, %v776
          %v778 = vsel %vm574, 1, 0
          %vm779 = vcmp.eq.s32.totalorder %v778, 1
          %v780 = vsel %vm779, %v777, 0.0
          %781 = vrot.lane.b32.xlu0 %v780, 2
          %v782 = vpop.permute.xlu0 %781
          %v783 = vld [vmem:[%s7] sm:$0xff]
          %v784 = vld [vmem:[%s7 + $0x8] sm:$0xff]
          %v785 = vpack.c.bf16 %v784, %v783
          %v786 = vpack.c.bf16 %v782, %v782
          %787 = vrot.lane.b32.xlu0 %v780, 1
          %v788 = vpop.permute.xlu0 %787
          %v789 = vld [vmem:[%s7 + $0x10] sm:$0xff]
          %v790 = vld [vmem:[%s7 + $0x18] sm:$0xff]
          %v791 = vpack.c.bf16 %v790, %v789
          %v792 = vpack.c.bf16 %v788, %v788
          %vm793 = vcmask 64512
          %v795 = vsel %vm793, %v791, 0
          %vm797 = vcmask 1043456
          %v799 = vsel %vm797, %v792, 0
          %801 = vmatprep.subr.bf16.mxu0 0
          %802 = vmatpush1.bf16.msra.mxu0 %v799
          %803 = vmatprep.subr.bf16.mxu0 0
          %804 = vmatpush1.bf16.msra.mxu0 0
          %805 = vmatprep.subr.bf16.mxu0 0
          %806 = vmatpush1.bf16.msra.mxu0 0
          %807 = vmatprep.subr.bf16.mxu0 0
          %808 = vmatpush1.bf16.msra.mxu0 0
          %809 = vmatprep.subr.bf16.mxu0 0
          %810 = vmatpush1.bf16.msra.mxu0 0
          %811 = vmatprep.subr.bf16.mxu0 0
          %812 = vmatpush1.bf16.msra.mxu0 0
          %813 = vmatprep.subr.bf16.mxu0 0
          %814 = vmatpush1.bf16.msra.mxu0 0
          %815 = vmatprep.subr.bf16.mxu0 0
          %816 = vmatpush1.bf16.msra.mxu0 0
          %817 = vmatprep.subr.bf16.mxu0 0
          %818 = vmatpush1.bf16.msra.mxu0 0
          %819 = vmatprep.subr.bf16.mxu0 0
          %820 = vmatpush1.bf16.msra.mxu0 0
          %821 = vmatprep.subr.bf16.mxu0 0
          %822 = vmatpush1.bf16.msra.mxu0 0
          %823 = vmatprep.subr.bf16.mxu0 0
          %824 = vmatpush1.bf16.msra.mxu0 0
          %825 = vmatprep.subr.bf16.mxu0 0
          %826 = vmatpush1.bf16.msra.mxu0 0
          %827 = vmatprep.subr.bf16.mxu0 0
          %828 = vmatpush1.bf16.msra.mxu0 0
          %829 = vmatprep.subr.bf16.mxu0 0
          %830 = vmatpush1.bf16.msra.mxu0 0
          %831 = vmatprep.subr.bf16.mxu0 0
          %832 = vmatpush1.bf16.msra.mxu0 0
          %833 = vmatprep.mubr.bf16.mxu0 0
          %834 = vmatmul.mubr.bf16.gmra.mrb[0].mxu0 %v795
          %v835 = vpop.f32.mrb[0].mxu0
          %v836 = vadd.f32 0.0, %v835
          %v837 = vpop.f32.mrb[0].mxu0
          %v838 = vpop.f32.mrb[0].mxu0
          %v839 = vadd.f32 0.0, %v838
          %v840 = vpop.f32.mrb[0].mxu0
          %841 = vdwg.mxu0
          %v843 = vsel %vm793, %v785, 0
          %v846 = vsel %vm797, %v786, 0
          %848 = vmatprep.subr.bf16.mxu0 0
          %849 = vmatpush1.bf16.msra.mxu0 %v846
          %850 = vmatprep.subr.bf16.mxu0 0
          %851 = vmatpush1.bf16.msra.mxu0 0
          %852 = vmatprep.subr.bf16.mxu0 0
          %853 = vmatpush1.bf16.msra.mxu0 0
          %854 = vmatprep.subr.bf16.mxu0 0
          %855 = vmatpush1.bf16.msra.mxu0 0
          %856 = vmatprep.subr.bf16.mxu0 0
          %857 = vmatpush1.bf16.msra.mxu0 0
          %858 = vmatprep.subr.bf16.mxu0 0
          %859 = vmatpush1.bf16.msra.mxu0 0
          %860 = vmatprep.subr.bf16.mxu0 0
          %861 = vmatpush1.bf16.msra.mxu0 0
          %862 = vmatprep.subr.bf16.mxu0 0
          %863 = vmatpush1.bf16.msra.mxu0 0
          %864 = vmatprep.subr.bf16.mxu0 0
          %865 = vmatpush1.bf16.msra.mxu0 0
          %866 = vmatprep.subr.bf16.mxu0 0
          %867 = vmatpush1.bf16.msra.mxu0 0
          %868 = vmatprep.subr.bf16.mxu0 0
          %869 = vmatpush1.bf16.msra.mxu0 0
          %870 = vmatprep.subr.bf16.mxu0 0
          %871 = vmatpush1.bf16.msra.mxu0 0
          %872 = vmatprep.subr.bf16.mxu0 0
          %873 = vmatpush1.bf16.msra.mxu0 0
          %874 = vmatprep.subr.bf16.mxu0 0
          %875 = vmatpush1.bf16.msra.mxu0 0
          %876 = vmatprep.subr.bf16.mxu0 0
          %877 = vmatpush1.bf16.msra.mxu0 0
          %878 = vmatprep.subr.bf16.mxu0 0
          %879 = vmatpush1.bf16.msra.mxu0 0
          %880 = vmatprep.mubr.bf16.mxu0 0
          %881 = vmatmul.mubr.bf16.gmra.mrb[0].mxu0 %v843
          %v882 = vpop.f32.mrb[0].mxu0
          %v883 = vadd.f32 %v836, %v882
          %v884 = vpop.f32.mrb[0].mxu0
          %v885 = vpop.f32.mrb[0].mxu0
          %v886 = vadd.f32 %v839, %v885
          %v887 = vpop.f32.mrb[0].mxu0
          %888 = vdwg.mxu0
          %v889 = vld [vmem:[%s7 + $0x20] sm:$0xff]
          %v890 = vld [vmem:[%s7 + $0x28] sm:$0xff]
          %v891 = vpack.c.bf16 %v890, %v889
          %v892 = vpack.c.bf16 %v780, %v780
          %v894 = vsel %vm793, %v891, 0
          %v897 = vsel %vm797, %v892, 0
          %899 = vmatprep.subr.bf16.mxu0 0
          %900 = vmatpush1.bf16.msra.mxu0 %v897
          %901 = vmatprep.subr.bf16.mxu0 0
          %902 = vmatpush1.bf16.msra.mxu0 0
          %903 = vmatprep.subr.bf16.mxu0 0
          %904 = vmatpush1.bf16.msra.mxu0 0
          %905 = vmatprep.subr.bf16.mxu0 0
          %906 = vmatpush1.bf16.msra.mxu0 0
          %907 = vmatprep.subr.bf16.mxu0 0
          %908 = vmatpush1.bf16.msra.mxu0 0
          %909 = vmatprep.subr.bf16.mxu0 0
          %910 = vmatpush1.bf16.msra.mxu0 0
          %911 = vmatprep.subr.bf16.mxu0 0
          %912 = vmatpush1.bf16.msra.mxu0 0
          %913 = vmatprep.subr.bf16.mxu0 0
          %914 = vmatpush1.bf16.msra.mxu0 0
          %915 = vmatprep.subr.bf16.mxu0 0
          %916 = vmatpush1.bf16.msra.mxu0 0
          %917 = vmatprep.subr.bf16.mxu0 0
          %918 = vmatpush1.bf16.msra.mxu0 0
          %919 = vmatprep.subr.bf16.mxu0 0
          %920 = vmatpush1.bf16.msra.mxu0 0
          %921 = vmatprep.subr.bf16.mxu0 0
          %922 = vmatpush1.bf16.msra.mxu0 0
          %923 = vmatprep.subr.bf16.mxu0 0
          %924 = vmatpush1.bf16.msra.mxu0 0
          %925 = vmatprep.subr.bf16.mxu0 0
          %926 = vmatpush1.bf16.msra.mxu0 0
          %927 = vmatprep.subr.bf16.mxu0 0
          %928 = vmatpush1.bf16.msra.mxu0 0
          %929 = vmatprep.subr.bf16.mxu0 0
          %930 = vmatpush1.bf16.msra.mxu0 0
          %931 = vmatprep.mubr.bf16.mxu0 0
          %932 = vmatmul.mubr.bf16.gmra.mrb[0].mxu0 %v894
          %v933 = vpop.f32.mrb[0].mxu0
          %v934 = vadd.f32 0.0, %v933
          %v935 = vpop.f32.mrb[0].mxu0
          %v936 = vpop.f32.mrb[0].mxu0
          %v937 = vadd.f32 0.0, %v936
          %v938 = vpop.f32.mrb[0].mxu0
          %939 = vdwg.mxu0
          %v940 = vadd.f32 %v883, %v934
          %v941 = vadd.f32 %v886, %v937
          %942 = vrot.lane.b32.xlu0 %v780, 127
          %v943 = vpop.permute.xlu0 %942
          %v944 = vld [vmem:[%s7 + $0x30] sm:$0xff]
          %v945 = vld [vmem:[%s7 + $0x38] sm:$0xff]
          %v946 = vpack.c.bf16 %v945, %v944
          %v947 = vpack.c.bf16 %v943, %v943
          %v949 = vsel %vm793, %v946, 0
          %v952 = vsel %vm797, %v947, 0
          %954 = vmatprep.subr.bf16.mxu0 0
          %955 = vmatpush1.bf16.msra.mxu0 %v952
          %956 = vmatprep.subr.bf16.mxu0 0
          %957 = vmatpush1.bf16.msra.mxu0 0
          %958 = vmatprep.subr.bf16.mxu0 0
          %959 = vmatpush1.bf16.msra.mxu0 0
          %960 = vmatprep.subr.bf16.mxu0 0
          %961 = vmatpush1.bf16.msra.mxu0 0
          %962 = vmatprep.subr.bf16.mxu0 0
          %963 = vmatpush1.bf16.msra.mxu0 0
          %964 = vmatprep.subr.bf16.mxu0 0
          %965 = vmatpush1.bf16.msra.mxu0 0
          %966 = vmatprep.subr.bf16.mxu0 0
          %967 = vmatpush1.bf16.msra.mxu0 0
          %968 = vmatprep.subr.bf16.mxu0 0
          %969 = vmatpush1.bf16.msra.mxu0 0
          %970 = vmatprep.subr.bf16.mxu0 0
          %971 = vmatpush1.bf16.msra.mxu0 0
          %972 = vmatprep.subr.bf16.mxu0 0
          %973 = vmatpush1.bf16.msra.mxu0 0
          %974 = vmatprep.subr.bf16.mxu0 0
          %975 = vmatpush1.bf16.msra.mxu0 0
          %976 = vmatprep.subr.bf16.mxu0 0
          %977 = vmatpush1.bf16.msra.mxu0 0
          %978 = vmatprep.subr.bf16.mxu0 0
          %979 = vmatpush1.bf16.msra.mxu0 0
          %980 = vmatprep.subr.bf16.mxu0 0
          %981 = vmatpush1.bf16.msra.mxu0 0
          %982 = vmatprep.subr.bf16.mxu0 0
          %983 = vmatpush1.bf16.msra.mxu0 0
          %984 = vmatprep.subr.bf16.mxu0 0
          %985 = vmatpush1.bf16.msra.mxu0 0
          %986 = vmatprep.mubr.bf16.mxu0 0
          %987 = vmatmul.mubr.bf16.gmra.mrb[0].mxu0 %v949
          %v988 = vpop.f32.mrb[0].mxu0
          %v989 = vadd.f32 0.0, %v988
          %v990 = vpop.f32.mrb[0].mxu0
          %v991 = vpop.f32.mrb[0].mxu0
          %v992 = vadd.f32 0.0, %v991
          %v993 = vpop.f32.mrb[0].mxu0
          %994 = vdwg.mxu0
          %v995 = vadd.f32 %v940, %v989
          %v996 = vadd.f32 %v941, %v992
          %997 = vrot.lane.b32.xlu0 %v780, 126
          %v998 = vpop.permute.xlu0 %997
          %v999 = vld [vmem:[%s7 + $0x40] sm:$0xff]
          %v1000 = vld [vmem:[%s7 + $0x48] sm:$0xff]
          %v1001 = vpack.c.bf16 %v1000, %v999
          %v1002 = vpack.c.bf16 %v998, %v998
          %v1004 = vsel %vm793, %v1001, 0
          %v1007 = vsel %vm797, %v1002, 0
          %1009 = vmatprep.subr.bf16.mxu0 0
          %1010 = vmatpush1.bf16.msra.mxu0 %v1007
          %1011 = vmatprep.subr.bf16.mxu0 0
          %1012 = vmatpush1.bf16.msra.mxu0 0
          %1013 = vmatprep.subr.bf16.mxu0 0
          %1014 = vmatpush1.bf16.msra.mxu0 0
          %1015 = vmatprep.subr.bf16.mxu0 0
          %1016 = vmatpush1.bf16.msra.mxu0 0
          %1017 = vmatprep.subr.bf16.mxu0 0
          %1018 = vmatpush1.bf16.msra.mxu0 0
          %1019 = vmatprep.subr.bf16.mxu0 0
          %1020 = vmatpush1.bf16.msra.mxu0 0
          %1021 = vmatprep.subr.bf16.mxu0 0
          %1022 = vmatpush1.bf16.msra.mxu0 0
          %1023 = vmatprep.subr.bf16.mxu0 0
          %1024 = vmatpush1.bf16.msra.mxu0 0
          %1025 = vmatprep.subr.bf16.mxu0 0
          %1026 = vmatpush1.bf16.msra.mxu0 0
          %1027 = vmatprep.subr.bf16.mxu0 0
          %1028 = vmatpush1.bf16.msra.mxu0 0
          %1029 = vmatprep.subr.bf16.mxu0 0
          %1030 = vmatpush1.bf16.msra.mxu0 0
          %1031 = vmatprep.subr.bf16.mxu0 0
          %1032 = vmatpush1.bf16.msra.mxu0 0
          %1033 = vmatprep.subr.bf16.mxu0 0
          %1034 = vmatpush1.bf16.msra.mxu0 0
          %1035 = vmatprep.subr.bf16.mxu0 0
          %1036 = vmatpush1.bf16.msra.mxu0 0
          %1037 = vmatprep.subr.bf16.mxu0 0
          %1038 = vmatpush1.bf16.msra.mxu0 0
          %1039 = vmatprep.subr.bf16.mxu0 0
          %1040 = vmatpush1.bf16.msra.mxu0 0
          %1041 = vmatprep.mubr.bf16.mxu0 0
          %1042 = vmatmul.mubr.bf16.gmra.mrb[0].mxu0 %v1004
          %v1043 = vpop.f32.mrb[0].mxu0
          %v1044 = vadd.f32 0.0, %v1043
          %v1045 = vpop.f32.mrb[0].mxu0
          %v1046 = vpop.f32.mrb[0].mxu0
          %v1047 = vadd.f32 0.0, %v1046
          %v1048 = vpop.f32.mrb[0].mxu0
          %1049 = vdwg.mxu0
          %v1050 = vadd.f32 %v995, %v1044
          %v1051 = vadd.f32 %v996, %v1047
          %v1052 = vld [vmem:[%s8] sm:$0xff]
          %v1053 = vld [vmem:[%s8 + $0x8] sm:$0xff]
          %1055 = vset.pattern.permute.xlu0 0
          %1056 = vperm.xlu0 %1055, %v1052
          %v1057 = vpop.permute.xlu0 %1056
          %1060 = vset.pattern.permute.xlu0 0
          %1061 = vperm.xlu0 %1060, %v1053
          %v1062 = vpop.permute.xlu0 %1061
          %v1064 = vadd.f32 %v1050, %v1057
          %v1065 = vadd.f32 %v1051, %v1062
          %v1066 = vmax.f32 %v1064, 0.0
          %v1067 = vmax.f32 %v1065, 0.0
          %v1068 = vsel %vm779, %v1066, 0.0
          %v1069 = vsel %vm779, %v1067, 0.0
          %1070 = vrot.lane.b32.xlu0 %v1068, 2
          %v1071 = vpop.permute.xlu0 %1070
          %1072 = vrot.lane.b32.xlu0 %v1069, 2
          %v1073 = vpop.permute.xlu0 %1072
          %v1074 = vld [vmem:[%s9] sm:$0xff]
          %v1075 = vpack.c.bf16 %v1074, %v1074
          %v1076 = vpack.c.bf16 %v1073, %v1071
          %1077 = vrot.lane.b32.xlu0 %v1068, 1
          %v1078 = vpop.permute.xlu0 %1077
          %1079 = vrot.lane.b32.xlu0 %v1069, 1
          %v1080 = vpop.permute.xlu0 %1079
          %v1081 = vld [vmem:[%s9 + $0x8] sm:$0xff]
          %v1082 = vpack.c.bf16 %v1081, %v1081
          %v1083 = vpack.c.bf16 %v1080, %v1078
          %vm1084 = vcmask 130048
          %v1086 = vsel %vm1084, %v1082, 0
          %1088 = vmatprep.subr.bf16.mxu0 0
          %1089 = vmatpush1.bf16.msra.mxu0 %v1083
          %1090 = vmatprep.subr.bf16.mxu0 0
          %1091 = vmatpush1.bf16.msra.mxu0 0
          %1092 = vmatprep.subr.bf16.mxu0 0
          %1093 = vmatpush1.bf16.msra.mxu0 0
          %1094 = vmatprep.subr.bf16.mxu0 0
          %1095 = vmatpush1.bf16.msra.mxu0 0
          %1096 = vmatprep.subr.bf16.mxu0 0
          %1097 = vmatpush1.bf16.msra.mxu0 0
          %1098 = vmatprep.subr.bf16.mxu0 0
          %1099 = vmatpush1.bf16.msra.mxu0 0
          %1100 = vmatprep.subr.bf16.mxu0 0
          %1101 = vmatpush1.bf16.msra.mxu0 0
          %1102 = vmatprep.subr.bf16.mxu0 0
          %1103 = vmatpush1.bf16.msra.mxu0 0
          %1104 = vmatprep.subr.bf16.mxu0 0
          %1105 = vmatpush1.bf16.msra.mxu0 0
          %1106 = vmatprep.subr.bf16.mxu0 0
          %1107 = vmatpush1.bf16.msra.mxu0 0
          %1108 = vmatprep.subr.bf16.mxu0 0
          %1109 = vmatpush1.bf16.msra.mxu0 0
          %1110 = vmatprep.subr.bf16.mxu0 0
          %1111 = vmatpush1.bf16.msra.mxu0 0
          %1112 = vmatprep.subr.bf16.mxu0 0
          %1113 = vmatpush1.bf16.msra.mxu0 0
          %1114 = vmatprep.subr.bf16.mxu0 0
          %1115 = vmatpush1.bf16.msra.mxu0 0
          %1116 = vmatprep.subr.bf16.mxu0 0
          %1117 = vmatpush1.bf16.msra.mxu0 0
          %1118 = vmatprep.subr.bf16.mxu0 0
          %1119 = vmatpush1.bf16.msra.mxu0 0
          %1120 = vmatprep.mubr.bf16.mxu0 0
          %1121 = vmatmul.mubr.bf16.gmra.mrb[0].mxu0 %v1086
          %v1122 = vpop.f32.mrb[0].mxu0
          %v1123 = vadd.f32 0.0, %v1122
          %v1124 = vpop.f32.mrb[0].mxu0
          %v1125 = vpop.f32.mrb[0].mxu0
          %v1126 = vpop.f32.mrb[0].mxu0
          %1127 = vdwg.mxu0
          %v1129 = vsel %vm1084, %v1075, 0
          %1131 = vmatprep.subr.bf16.mxu0 0
          %1132 = vmatpush1.bf16.msra.mxu0 %v1076
          %1133 = vmatprep.subr.bf16.mxu0 0
          %1134 = vmatpush1.bf16.msra.mxu0 0
          %1135 = vmatprep.subr.bf16.mxu0 0
          %1136 = vmatpush1.bf16.msra.mxu0 0
          %1137 = vmatprep.subr.bf16.mxu0 0
          %1138 = vmatpush1.bf16.msra.mxu0 0
          %1139 = vmatprep.subr.bf16.mxu0 0
          %1140 = vmatpush1.bf16.msra.mxu0 0
          %1141 = vmatprep.subr.bf16.mxu0 0
          %1142 = vmatpush1.bf16.msra.mxu0 0
          %1143 = vmatprep.subr.bf16.mxu0 0
          %1144 = vmatpush1.bf16.msra.mxu0 0
          %1145 = vmatprep.subr.bf16.mxu0 0
          %1146 = vmatpush1.bf16.msra.mxu0 0
          %1147 = vmatprep.subr.bf16.mxu0 0
          %1148 = vmatpush1.bf16.msra.mxu0 0
          %1149 = vmatprep.subr.bf16.mxu0 0
          %1150 = vmatpush1.bf16.msra.mxu0 0
          %1151 = vmatprep.subr.bf16.mxu0 0
          %1152 = vmatpush1.bf16.msra.mxu0 0
          %1153 = vmatprep.subr.bf16.mxu0 0
          %1154 = vmatpush1.bf16.msra.mxu0 0
          %1155 = vmatprep.subr.bf16.mxu0 0
          %1156 = vmatpush1.bf16.msra.mxu0 0
          %1157 = vmatprep.subr.bf16.mxu0 0
          %1158 = vmatpush1.bf16.msra.mxu0 0
          %1159 = vmatprep.subr.bf16.mxu0 0
          %1160 = vmatpush1.bf16.msra.mxu0 0
          %1161 = vmatprep.subr.bf16.mxu0 0
          %1162 = vmatpush1.bf16.msra.mxu0 0
          %1163 = vmatprep.mubr.bf16.mxu0 0
          %1164 = vmatmul.mubr.bf16.gmra.mrb[0].mxu0 %v1129
          %v1165 = vpop.f32.mrb[0].mxu0
          %v1166 = vadd.f32 %v1123, %v1165
          %v1167 = vpop.f32.mrb[0].mxu0
          %v1168 = vpop.f32.mrb[0].mxu0
          %v1169 = vpop.f32.mrb[0].mxu0
          %1170 = vdwg.mxu0
          %v1171 = vld [vmem:[%s9 + $0x10] sm:$0xff]
          %v1172 = vpack.c.bf16 %v1171, %v1171
          %v1173 = vpack.c.bf16 %v1069, %v1068
          %v1175 = vsel %vm1084, %v1172, 0
          %1177 = vmatprep.subr.bf16.mxu0 0
          %1178 = vmatpush1.bf16.msra.mxu0 %v1173
          %1179 = vmatprep.subr.bf16.mxu0 0
          %1180 = vmatpush1.bf16.msra.mxu0 0
          %1181 = vmatprep.subr.bf16.mxu0 0
          %1182 = vmatpush1.bf16.msra.mxu0 0
          %1183 = vmatprep.subr.bf16.mxu0 0
          %1184 = vmatpush1.bf16.msra.mxu0 0
          %1185 = vmatprep.subr.bf16.mxu0 0
          %1186 = vmatpush1.bf16.msra.mxu0 0
          %1187 = vmatprep.subr.bf16.mxu0 0
          %1188 = vmatpush1.bf16.msra.mxu0 0
          %1189 = vmatprep.subr.bf16.mxu0 0
          %1190 = vmatpush1.bf16.msra.mxu0 0
          %1191 = vmatprep.subr.bf16.mxu0 0
          %1192 = vmatpush1.bf16.msra.mxu0 0
          %1193 = vmatprep.subr.bf16.mxu0 0
          %1194 = vmatpush1.bf16.msra.mxu0 0
          %1195 = vmatprep.subr.bf16.mxu0 0
          %1196 = vmatpush1.bf16.msra.mxu0 0
          %1197 = vmatprep.subr.bf16.mxu0 0
          %1198 = vmatpush1.bf16.msra.mxu0 0
          %1199 = vmatprep.subr.bf16.mxu0 0
          %1200 = vmatpush1.bf16.msra.mxu0 0
          %1201 = vmatprep.subr.bf16.mxu0 0
          %1202 = vmatpush1.bf16.msra.mxu0 0
          %1203 = vmatprep.subr.bf16.mxu0 0
          %1204 = vmatpush1.bf16.msra.mxu0 0
          %1205 = vmatprep.subr.bf16.mxu0 0
          %1206 = vmatpush1.bf16.msra.mxu0 0
          %1207 = vmatprep.subr.bf16.mxu0 0
          %1208 = vmatpush1.bf16.msra.mxu0 0
          %1209 = vmatprep.mubr.bf16.mxu0 0
          %1210 = vmatmul.mubr.bf16.gmra.mrb[0].mxu0 %v1175
          %v1211 = vpop.f32.mrb[0].mxu0
          %v1212 = vadd.f32 0.0, %v1211
          %v1213 = vpop.f32.mrb[0].mxu0
          %v1214 = vpop.f32.mrb[0].mxu0
          %v1215 = vpop.f32.mrb[0].mxu0
          %1216 = vdwg.mxu0
          %v1217 = vadd.f32 %v1166, %v1212
          %1218 = vrot.lane.b32.xlu0 %v1068, 127
          %v1219 = vpop.permute.xlu0 %1218
          %1220 = vrot.lane.b32.xlu0 %v1069, 127
          %v1221 = vpop.permute.xlu0 %1220
          %v1222 = vld [vmem:[%s9 + $0x18] sm:$0xff]
          %v1223 = vpack.c.bf16 %v1222, %v1222
          %v1224 = vpack.c.bf16 %v1221, %v1219
          %v1226 = vsel %vm1084, %v1223, 0
          %1228 = vmatprep.subr.bf16.mxu0 0
          %1229 = vmatpush1.bf16.msra.mxu0 %v1224
          %1230 = vmatprep.subr.bf16.mxu0 0
          %1231 = vmatpush1.bf16.msra.mxu0 0
          %1232 = vmatprep.subr.bf16.mxu0 0
          %1233 = vmatpush1.bf16.msra.mxu0 0
          %1234 = vmatprep.subr.bf16.mxu0 0
          %1235 = vmatpush1.bf16.msra.mxu0 0
          %1236 = vmatprep.subr.bf16.mxu0 0
          %1237 = vmatpush1.bf16.msra.mxu0 0
          %1238 = vmatprep.subr.bf16.mxu0 0
          %1239 = vmatpush1.bf16.msra.mxu0 0
          %1240 = vmatprep.subr.bf16.mxu0 0
          %1241 = vmatpush1.bf16.msra.mxu0 0
          %1242 = vmatprep.subr.bf16.mxu0 0
          %1243 = vmatpush1.bf16.msra.mxu0 0
          %1244 = vmatprep.subr.bf16.mxu0 0
          %1245 = vmatpush1.bf16.msra.mxu0 0
          %1246 = vmatprep.subr.bf16.mxu0 0
          %1247 = vmatpush1.bf16.msra.mxu0 0
          %1248 = vmatprep.subr.bf16.mxu0 0
          %1249 = vmatpush1.bf16.msra.mxu0 0
          %1250 = vmatprep.subr.bf16.mxu0 0
          %1251 = vmatpush1.bf16.msra.mxu0 0
          %1252 = vmatprep.subr.bf16.mxu0 0
          %1253 = vmatpush1.bf16.msra.mxu0 0
          %1254 = vmatprep.subr.bf16.mxu0 0
          %1255 = vmatpush1.bf16.msra.mxu0 0
          %1256 = vmatprep.subr.bf16.mxu0 0
          %1257 = vmatpush1.bf16.msra.mxu0 0
          %1258 = vmatprep.subr.bf16.mxu0 0
          %1259 = vmatpush1.bf16.msra.mxu0 0
          %1260 = vmatprep.mubr.bf16.mxu0 0
          %1261 = vmatmul.mubr.bf16.gmra.mrb[0].mxu0 %v1226
          %v1262 = vpop.f32.mrb[0].mxu0
          %v1263 = vadd.f32 0.0, %v1262
          %v1264 = vpop.f32.mrb[0].mxu0
          %v1265 = vpop.f32.mrb[0].mxu0
          %v1266 = vpop.f32.mrb[0].mxu0
          %1267 = vdwg.mxu0
          %v1268 = vadd.f32 %v1217, %v1263
          %1269 = vrot.lane.b32.xlu0 %v1068, 126
          %v1270 = vpop.permute.xlu0 %1269
          %1271 = vrot.lane.b32.xlu0 %v1069, 126
          %v1272 = vpop.permute.xlu0 %1271
          %v1273 = vld [vmem:[%s9 + $0x20] sm:$0xff]
          %v1274 = vpack.c.bf16 %v1273, %v1273
          %v1275 = vpack.c.bf16 %v1272, %v1270
          %v1277 = vsel %vm1084, %v1274, 0
          %1279 = vmatprep.subr.bf16.mxu0 0
          %1280 = vmatpush1.bf16.msra.mxu0 %v1275
          %1281 = vmatprep.subr.bf16.mxu0 0
          %1282 = vmatpush1.bf16.msra.mxu0 0
          %1283 = vmatprep.subr.bf16.mxu0 0
          %1284 = vmatpush1.bf16.msra.mxu0 0
          %1285 = vmatprep.subr.bf16.mxu0 0
          %1286 = vmatpush1.bf16.msra.mxu0 0
          %1287 = vmatprep.subr.bf16.mxu0 0
          %1288 = vmatpush1.bf16.msra.mxu0 0
          %1289 = vmatprep.subr.bf16.mxu0 0
          %1290 = vmatpush1.bf16.msra.mxu0 0
          %1291 = vmatprep.subr.bf16.mxu0 0
          %1292 = vmatpush1.bf16.msra.mxu0 0
          %1293 = vmatprep.subr.bf16.mxu0 0
          %1294 = vmatpush1.bf16.msra.mxu0 0
          %1295 = vmatprep.subr.bf16.mxu0 0
          %1296 = vmatpush1.bf16.msra.mxu0 0
          %1297 = vmatprep.subr.bf16.mxu0 0
          %1298 = vmatpush1.bf16.msra.mxu0 0
          %1299 = vmatprep.subr.bf16.mxu0 0
          %1300 = vmatpush1.bf16.msra.mxu0 0
          %1301 = vmatprep.subr.bf16.mxu0 0
          %1302 = vmatpush1.bf16.msra.mxu0 0
          %1303 = vmatprep.subr.bf16.mxu0 0
          %1304 = vmatpush1.bf16.msra.mxu0 0
          %1305 = vmatprep.subr.bf16.mxu0 0
          %1306 = vmatpush1.bf16.msra.mxu0 0
          %1307 = vmatprep.subr.bf16.mxu0 0
          %1308 = vmatpush1.bf16.msra.mxu0 0
          %1309 = vmatprep.subr.bf16.mxu0 0
          %1310 = vmatpush1.bf16.msra.mxu0 0
          %1311 = vmatprep.mubr.bf16.mxu0 0
          %1312 = vmatmul.mubr.bf16.gmra.mrb[0].mxu0 %v1277
          %v1313 = vpop.f32.mrb[0].mxu0
          %v1314 = vadd.f32 0.0, %v1313
          %v1315 = vpop.f32.mrb[0].mxu0
          %v1316 = vpop.f32.mrb[0].mxu0
          %v1317 = vpop.f32.mrb[0].mxu0
          %1318 = vdwg.mxu0
          %v1319 = vadd.f32 %v1268, %v1314
          %v1320 = vld [vmem:[%s10] sm:$0xff]
          %1322 = vset.pattern.permute.xlu0 0
          %1323 = vperm.xlu0 %1322, %v1320
          %v1324 = vpop.permute.xlu0 %1323
          %v1326 = vadd.f32 %v1319, %v1324
          %v1327 = vsel %vm779, %v1326, 0.0
          %v1328 = vld [vmem:[%s11] sm:$0x3]
          %v1330 = vsel %vm793, %v1328, 0
          %1332 = vmatprep.subr.mxu0 0.0
          %1333 = vmatpush1.msra.mxu0 %v1327
          %1334 = vmatprep.subr.mxu0 0.0
          %1335 = vmatpush1.msra.mxu0 0.0
          %1336 = vmatprep.subr.mxu0 0.0
          %1337 = vmatpush1.msra.mxu0 0.0
          %1338 = vmatprep.subr.mxu0 0.0
          %1339 = vmatpush1.msra.mxu0 0.0
          %1340 = vmatprep.subr.mxu0 0.0
          %1341 = vmatpush1.msra.mxu0 0.0
          %1342 = vmatprep.subr.mxu0 0.0
          %1343 = vmatpush1.msra.mxu0 0.0
          %1344 = vmatprep.subr.mxu0 0.0
          %1345 = vmatpush1.msra.mxu0 0.0
          %1346 = vmatprep.subr.mxu0 0.0
          %1347 = vmatpush1.msra.mxu0 0.0
          %1348 = vmatprep.subr.mxu0 0.0
          %1349 = vmatpush1.msra.mxu0 0.0
          %1350 = vmatprep.subr.mxu0 0.0
          %1351 = vmatpush1.msra.mxu0 0.0
          %1352 = vmatprep.subr.mxu0 0.0
          %1353 = vmatpush1.msra.mxu0 0.0
          %1354 = vmatprep.subr.mxu0 0.0
          %1355 = vmatpush1.msra.mxu0 0.0
          %1356 = vmatprep.subr.mxu0 0.0
          %1357 = vmatpush1.msra.mxu0 0.0
          %1358 = vmatprep.subr.mxu0 0.0
          %1359 = vmatpush1.msra.mxu0 0.0
          %1360 = vmatprep.subr.mxu0 0.0
          %1361 = vmatpush1.msra.mxu0 0.0
          %1362 = vmatprep.subr.mxu0 0.0
          %1363 = vmatpush1.msra.mxu0 0.0
          %1364 = vmatprep.subr.mxu0 0.0
          %1365 = vmatpush1.msra.mxu0 0.0
          %1366 = vmatprep.subr.mxu0 0.0
          %1367 = vmatpush1.msra.mxu0 0.0
          %1368 = vmatprep.subr.mxu0 0.0
          %1369 = vmatpush1.msra.mxu0 0.0
          %1370 = vmatprep.subr.mxu0 0.0
          %1371 = vmatpush1.msra.mxu0 0.0
          %1372 = vmatprep.subr.mxu0 0.0
          %1373 = vmatpush1.msra.mxu0 0.0
          %1374 = vmatprep.subr.mxu0 0.0
          %1375 = vmatpush1.msra.mxu0 0.0
          %1376 = vmatprep.subr.mxu0 0.0
          %1377 = vmatpush1.msra.mxu0 0.0
          %1378 = vmatprep.subr.mxu0 0.0
          %1379 = vmatpush1.msra.mxu0 0.0
          %1380 = vmatprep.subr.mxu0 0.0
          %1381 = vmatpush1.msra.mxu0 0.0
          %1382 = vmatprep.subr.mxu0 0.0
          %1383 = vmatpush1.msra.mxu0 0.0
          %1384 = vmatprep.subr.mxu0 0.0
          %1385 = vmatpush1.msra.mxu0 0.0
          %1386 = vmatprep.subr.mxu0 0.0
          %1387 = vmatpush1.msra.mxu0 0.0
          %1388 = vmatprep.subr.mxu0 0.0
          %1389 = vmatpush1.msra.mxu0 0.0
          %1390 = vmatprep.subr.mxu0 0.0
          %1391 = vmatpush1.msra.mxu0 0.0
          %1392 = vmatprep.subr.mxu0 0.0
          %1393 = vmatpush1.msra.mxu0 0.0
          %1394 = vmatprep.subr.mxu0 0.0
          %1395 = vmatpush1.msra.mxu0 0.0
          %1396 = vmatprep.mubr.f32.mxu0 0.0
          %1397 = vmatmul.mubr.f32.gmra.mrb[0].mxu0 %v1330
          %v1398 = vpop.f32.mrb[0].mxu0
          %v1399 = vadd.f32 0.0, %v1398
          %v1400 = vpop.f32.mrb[0].mxu0
          %1401 = vdwg.mxu0
          %1402 = vst [vmem:[#allocation2] sm:$0x3] %v1399
        $region80: #{forward.1} parent=71 // pred_fallthru
          _
        %v1403 = vld [vmem:[%s542] sm:$0x1]
        %v1404 = vlaneseq
        %v1405 = vshrl.u32 %v1404, 7
        %v1406 = vadd.s32 %v1405, 8
        %v1407 = vadd.s32 %v1405, 16
        %v1408 = vadd.s32 %v1405, 24
        %v1409 = vadd.s32 %v1405, 32
        %v1410 = vadd.s32 %v1405, 40
        %v1411 = vadd.s32 %v1405, 48
        %v1412 = vadd.s32 %v1405, 56
        %v1413 = vadd.s32 %v1405, 64
        %v1414 = vadd.s32 %v1405, 72
        %v1415 = vadd.s32 %v1405, 80
        %v1416 = vadd.s32 %v1405, 88
        %v1417 = vadd.s32 %v1405, 96
        %v1418 = vadd.s32 %v1405, 104
        %v1419 = vadd.s32 %v1405, 112
        %v1420 = vadd.s32 %v1405, 120
        %v1421 = vcvt.s32.f32 %v1405
        %v1422 = vcvt.s32.f32 %v1406
        %v1423 = vcvt.s32.f32 %v1407
        %v1424 = vcvt.s32.f32 %v1408
        %v1425 = vcvt.s32.f32 %v1409
        %v1426 = vcvt.s32.f32 %v1410
        %v1427 = vcvt.s32.f32 %v1411
        %v1428 = vcvt.s32.f32 %v1412
        %v1429 = vcvt.s32.f32 %v1413
        %v1430 = vcvt.s32.f32 %v1414
        %v1431 = vcvt.s32.f32 %v1415
        %v1432 = vcvt.s32.f32 %v1416
        %v1433 = vcvt.s32.f32 %v1417
        %v1434 = vcvt.s32.f32 %v1418
        %v1435 = vcvt.s32.f32 %v1419
        %v1436 = vcvt.s32.f32 %v1420
        %v1437 = vstv %s557
        %v1438 = vmul.f32 %v1421, %v1437
        %v1439 = vmul.f32 %v1422, %v1437
        %v1440 = vmul.f32 %v1423, %v1437
        %v1441 = vmul.f32 %v1424, %v1437
        %v1442 = vmul.f32 %v1425, %v1437
        %v1443 = vmul.f32 %v1426, %v1437
        %v1444 = vmul.f32 %v1427, %v1437
        %v1445 = vmul.f32 %v1428, %v1437
        %v1446 = vmul.f32 %v1429, %v1437
        %v1447 = vmul.f32 %v1430, %v1437
        %v1448 = vmul.f32 %v1431, %v1437
        %v1449 = vmul.f32 %v1432, %v1437
        %v1450 = vmul.f32 %v1433, %v1437
        %v1451 = vmul.f32 %v1434, %v1437
        %v1452 = vmul.f32 %v1435, %v1437
        %v1453 = vmul.f32 %v1436, %v1437
        %v1454 = vstv %s556
        %v1455 = vadd.f32 %v1454, %v1438
        %v1456 = vadd.f32 %v1454, %v1439
        %v1457 = vadd.f32 %v1454, %v1440
        %v1458 = vadd.f32 %v1454, %v1441
        %v1459 = vadd.f32 %v1454, %v1442
        %v1460 = vadd.f32 %v1454, %v1443
        %v1461 = vadd.f32 %v1454, %v1444
        %v1462 = vadd.f32 %v1454, %v1445
        %v1463 = vadd.f32 %v1454, %v1446
        %v1464 = vadd.f32 %v1454, %v1447
        %v1465 = vadd.f32 %v1454, %v1448
        %v1466 = vadd.f32 %v1454, %v1449
        %v1467 = vadd.f32 %v1454, %v1450
        %v1468 = vadd.f32 %v1454, %v1451
        %v1469 = vadd.f32 %v1454, %v1452
        %v1470 = vadd.f32 %v1454, %v1453
        %v1472 = vlaneseq
        %v1473 = vshrl.u32 %v1472, 7
        %v1474 = vsub.s32 0, %v1473
        %v1475 = vrot.slane %v1403, %v1474
        %v1477 = vsub.f32 %v1455, %v1475
        %v1478 = vsub.f32 %v1456, %v1475
        %v1479 = vsub.f32 %v1457, %v1475
        %v1480 = vsub.f32 %v1458, %v1475
        %v1481 = vsub.f32 %v1459, %v1475
        %v1482 = vsub.f32 %v1460, %v1475
        %v1483 = vsub.f32 %v1461, %v1475
        %v1484 = vsub.f32 %v1462, %v1475
        %v1485 = vsub.f32 %v1463, %v1475
        %v1486 = vsub.f32 %v1464, %v1475
        %v1487 = vsub.f32 %v1465, %v1475
        %v1488 = vsub.f32 %v1466, %v1475
        %v1489 = vsub.f32 %v1467, %v1475
        %v1490 = vsub.f32 %v1468, %v1475
        %v1491 = vsub.f32 %v1469, %v1475
        %v1492 = vsub.f32 %v1470, %v1475
        %v1493 = vmul.f32 %v1477, %v1477
        %v1494 = vmul.f32 %v1478, %v1478
        %v1495 = vmul.f32 %v1479, %v1479
        %v1496 = vmul.f32 %v1480, %v1480
        %v1497 = vmul.f32 %v1481, %v1481
        %v1498 = vmul.f32 %v1482, %v1482
        %v1499 = vmul.f32 %v1483, %v1483
        %v1500 = vmul.f32 %v1484, %v1484
        %v1501 = vmul.f32 %v1485, %v1485
        %v1502 = vmul.f32 %v1486, %v1486
        %v1503 = vmul.f32 %v1487, %v1487
        %v1504 = vmul.f32 %v1488, %v1488
        %v1505 = vmul.f32 %v1489, %v1489
        %v1506 = vmul.f32 %v1490, %v1490
        %v1507 = vmul.f32 %v1491, %v1491
        %v1508 = vmul.f32 %v1492, %v1492
        %v1509 = vsub.f32 0.0, %v1493
        %v1510 = vsub.f32 0.0, %v1494
        %v1511 = vsub.f32 0.0, %v1495
        %v1512 = vsub.f32 0.0, %v1496
        %v1513 = vsub.f32 0.0, %v1497
        %v1514 = vsub.f32 0.0, %v1498
        %v1515 = vsub.f32 0.0, %v1499
        %v1516 = vsub.f32 0.0, %v1500
        %v1517 = vsub.f32 0.0, %v1501
        %v1518 = vsub.f32 0.0, %v1502
        %v1519 = vsub.f32 0.0, %v1503
        %v1520 = vsub.f32 0.0, %v1504
        %v1521 = vsub.f32 0.0, %v1505
        %v1522 = vsub.f32 0.0, %v1506
        %v1523 = vsub.f32 0.0, %v1507
        %v1524 = vsub.f32 0.0, %v1508
        %v1525 = vmul.f32 %v1509, 1.442695
        %v1526 = vpow.pop %v1525
        %v1527 = vmul.f32 %v1510, 1.442695
        %v1528 = vpow.pop %v1527
        %v1529 = vmul.f32 %v1511, 1.442695
        %v1530 = vpow.pop %v1529
        %v1531 = vmul.f32 %v1512, 1.442695
        %v1532 = vpow.pop %v1531
        %v1533 = vmul.f32 %v1513, 1.442695
        %v1534 = vpow.pop %v1533
        %v1535 = vmul.f32 %v1514, 1.442695
        %v1536 = vpow.pop %v1535
        %v1537 = vmul.f32 %v1515, 1.442695
        %v1538 = vpow.pop %v1537
        %v1539 = vmul.f32 %v1516, 1.442695
        %v1540 = vpow.pop %v1539
        %v1541 = vmul.f32 %v1517, 1.442695
        %v1542 = vpow.pop %v1541
        %v1543 = vmul.f32 %v1518, 1.442695
        %v1544 = vpow.pop %v1543
        %v1545 = vmul.f32 %v1519, 1.442695
        %v1546 = vpow.pop %v1545
        %v1547 = vmul.f32 %v1520, 1.442695
        %v1548 = vpow.pop %v1547
        %v1549 = vmul.f32 %v1521, 1.442695
        %v1550 = vpow.pop %v1549
        %v1551 = vmul.f32 %v1522, 1.442695
        %v1552 = vpow.pop %v1551
        %v1553 = vmul.f32 %v1523, 1.442695
        %v1554 = vpow.pop %v1553
        %v1555 = vmul.f32 %v1524, 1.442695
        %v1556 = vpow.pop %v1555
        %v1557 = vpack.c.bf16 %v1528, %v1526
        %v1558 = vpack.c.bf16 %v1532, %v1530
        %v1559 = vpack.c.bf16 %v1536, %v1534
        %v1560 = vpack.c.bf16 %v1540, %v1538
        %v1561 = vpack.c.bf16 %v1544, %v1542
        %v1562 = vpack.c.bf16 %v1548, %v1546
        %v1563 = vpack.c.bf16 %v1552, %v1550
        %v1564 = vpack.c.bf16 %v1556, %v1554
        %v1565 = vld [vmem:[#allocation2] sm:$0x3]
        %v1566 = vpack.c.bf16 %v1565, %v1565
        %v1567 = vld [vmem:[%s12] sm:$0x3]
        %1569 = vset.pattern.permute.xlu0 0
        %1570 = vperm.xlu0 %1569, %v1567
        %v1571 = vpop.permute.xlu0 %1570
        %1573 = vmatprep.subr.bf16.mxu0 0
        %1574 = vmatpush1.bf16.msra.mxu0 %v1557
        %1575 = vmatprep.subr.bf16.mxu0 0
        %1576 = vmatpush1.bf16.msra.mxu0 %v1558
        %1577 = vmatprep.subr.bf16.mxu0 0
        %1578 = vmatpush1.bf16.msra.mxu0 %v1559
        %1579 = vmatprep.subr.bf16.mxu0 0
        %1580 = vmatpush1.bf16.msra.mxu0 %v1560
        %1581 = vmatprep.subr.bf16.mxu0 0
        %1582 = vmatpush1.bf16.msra.mxu0 %v1561
        %1583 = vmatprep.subr.bf16.mxu0 0
        %1584 = vmatpush1.bf16.msra.mxu0 %v1562
        %1585 = vmatprep.subr.bf16.mxu0 0
        %1586 = vmatpush1.bf16.msra.mxu0 %v1563
        %1587 = vmatprep.subr.bf16.mxu0 0
        %1588 = vmatpush1.bf16.msra.mxu0 %v1564
        %1589 = vmatprep.subr.bf16.mxu0 0
        %1590 = vmatpush1.bf16.msra.mxu0 0
        %1591 = vmatprep.subr.bf16.mxu0 0
        %1592 = vmatpush1.bf16.msra.mxu0 0
        %1593 = vmatprep.subr.bf16.mxu0 0
        %1594 = vmatpush1.bf16.msra.mxu0 0
        %1595 = vmatprep.subr.bf16.mxu0 0
        %1596 = vmatpush1.bf16.msra.mxu0 0
        %1597 = vmatprep.subr.bf16.mxu0 0
        %1598 = vmatpush1.bf16.msra.mxu0 0
        %1599 = vmatprep.subr.bf16.mxu0 0
        %1600 = vmatpush1.bf16.msra.mxu0 0
        %1601 = vmatprep.subr.bf16.mxu0 0
        %1602 = vmatpush1.bf16.msra.mxu0 0
        %1603 = vmatprep.subr.bf16.mxu0 0
        %1604 = vmatpush1.bf16.msra.mxu0 0
        %1605 = vmatprep.mubr.bf16.mxu0 0
        %1606 = vmatmul.mubr.bf16.gmra.mrb[0].mxu0 %v1566
        %v1607 = vpop.f32.mrb[0].mxu0
        %v1608 = vadd.f32 %v1571, %v1607
        %v1609 = vpop.f32.mrb[0].mxu0
        %v1610 = vpop.f32.mrb[0].mxu0
        %v1611 = vpop.f32.mrb[0].mxu0
        %1612 = vdwg.mxu0
        %1613 = vst [vmem:[%s548] sm:$0x1] %v1608
        %v1614 = vmax.f32 %v1608, 0.0
        %vm1615 = vcmp.ne.f32.partialorder %v1608, %v1608
        %v1616 = vadd.f32 %v1608, 0.0
        %v1617 = vand.u32 2147483647, %v1608
        %v1618 = vsub.f32 0.0, %v1617
        %v1619 = vmul.f32 %v1618, 1.442695
        %v1620 = vpow.pop %v1619
        %v1621 = vadd.f32 %v1620, 1.0
        %v1622 = vlog2.pop %v1621
        %v1623 = vmul.f32 %v1622, 0.6931472
        %v1624 = vmul.f32 -0.5, %v1620
        %v1625 = vadd.f32 %v1624, 1.0
        %v1626 = vmul.f32 %v1625, %v1620
        %v1627 = vand.u32 2147483647, %v1620
        %vm1628 = vcmp.lt.f32.partialorder %v1627, 0.0004427343
        %v1629 = vsel %vm1628, %v1626, %v1623
        %v1630 = vadd.f32 %v1614, %v1629
        %v1631 = vsel %vm1615, %v1616, %v1630
        %1632 = vst [vmem:[%s554 - $0x1] sm:$0x2] %v1631
        %p1633 = scmp.lt.s32.totalorder %s32, 1
        %s1634 = scalar_select %p1633, %s32, 1
        %p1635 = scmp.lt.s32.totalorder %s33, 0
        %s1636 = scalar_select %p1635, %s33, 0
        %s1637 = sadd.s32 %s1636, %s1634
        %s1638 = scalar_lea.vmem %s13, %s1637
        %p1639 = scmp.lt.s32.totalorder %s32, 1
        %s1640 = scalar_select %p1639, %s32, 1
        %p1641 = scmp.lt.s32.totalorder %s33, 0
        %s1642 = scalar_select %p1641, %s33, 0
        %s1643 = sadd.s32 %s1642, %s1640
        %s1644 = scalar_lea.vmem %s14, %s1643
        // Predicated region
        $region81: #{forward.1} parent=71 // pred_check
          %p1645 = pneg %p350
        $region82: #{forward.1} parent=71 // pred_check_branch
          %1647 = sbr.rel (%p1645) target = $region84
        $region83: #{forward.1} parent=71 // pred_region
          _
        $region84: #{forward.1} parent=71 // pred_fallthru
          _
        // Predicated region
        $region85: #{forward.1} parent=71 // pred_check
          %p1648 = pneg %p378
        $region86: #{forward.1} parent=71 // pred_check_branch
          %1650 = sbr.rel (%p1648) target = $region88
        $region87: #{forward.1} parent=71 // pred_region
          _
        $region88: #{forward.1} parent=71 // pred_fallthru
          _
      $region72: #{forward.1} parent=5 // pred_fallthru
        _
      %p1651 = scmp.le.s32.totalorder 2, %s23
      // Predicated region
      $region89: #{forward.1} parent=5 // pred_check
        %p1652 = pneg %p1651
      $region90: #{forward.1} parent=5 // pred_check_branch
        %1654 = sbr.rel (%p1652) target = $region92
      $region91: #{forward.1} parent=5 // pred_region
        %s1655 = ssub.s32 %s23, 2
        // Predicated region
        $region93: #{forward.1} parent=91 // pred_check
          %p1656 = pneg %p356
        $region94: #{forward.1} parent=91 // pred_check_branch
          %1658 = sbr.rel (%p1656) target = $region96
        $region95: #{forward.1} parent=91 // pred_region
          %p1659 = scmp.lt.s32.totalorder %s34, 1
          %s1660 = scalar_select %p1659, %s34, 1
          %p1661 = scmp.lt.s32.totalorder %s35, 0
          %s1662 = scalar_select %p1661, %s35, 0
          %s1663 = sadd.s32 %s1662, %s1660
          %s1664 = scalar_lea.vmem %s13, %s1663
        $region96: #{forward.1} parent=91 // pred_fallthru
          _
        // Predicated region
        $region97: #{forward.1} parent=91 // pred_check
          %p1665 = pneg %p384
        $region98: #{forward.1} parent=91 // pred_check_branch
          %1667 = sbr.rel (%p1665) target = $region100
        $region99: #{forward.1} parent=91 // pred_region
          %p1668 = scmp.lt.s32.totalorder %s34, 1
          %s1669 = scalar_select %p1668, %s34, 1
          %p1670 = scmp.lt.s32.totalorder %s35, 0
          %s1671 = scalar_select %p1670, %s35, 0
          %s1672 = sadd.s32 %s1671, %s1669
          %s1673 = scalar_lea.vmem %s14, %s1672
        $region100: #{forward.1} parent=91 // pred_fallthru
          _
      $region92: #{forward.1} parent=5 // pred_fallthru
        _
    $region6: #{forward.1} parent=1 // loop_footer
      %s27 = sadd.s32 1, %s23
    $region7: #{forward.1} parent=1 // loop_footer_branch
      %22 = sbr.rel target = $region3
    $region8: #{forward.1} parent=1 // loop_exit
      _
    %1674 = vsyncpa [#allocation5], 1
    %s1675 = scalar_lea.sflag [#allocation5], 1
    %1676 = vsyncpa %s1675, 1

</llo_original>
